<compile_context>
chip_gen: v7x
topology: tpu7x:2x2x1
jax: 0.10.0
libtpu: 0.0.40
codegen_flags: <defaults>
</compile_context>

<pallas_src>
import functools
import math

import jax
import jax.numpy as jnp
from jax import lax
from jax.experimental import pallas as pl
from jax.experimental.pallas import tpu as pltpu

_LANE = 128
_SUBLANE = 8
_VMEM_TILE_BUDGET = 20 << 20     # per-call double-buffered working-set target (bytes)


def _round_up(x, m):
    return ((x + m - 1) // m) * m


def _largest_divisor_leq(n, cap):
    for c in range(min(cap, n), 0, -1):
        if n % c == 0:
            return c
    return 1


def _vmem_limit_bytes():
    # Raise the scoped-VMEM limit (defaults: 16 MiB v5e / 32 MiB v6e,v7x) while
    # staying comfortably below physical capacity (128 MiB v5e/v6e, 64 MiB v7x).
    try:
        cap = int(pltpu.get_tpu_info().vmem_capacity_bytes)
    except Exception:
        cap = 64 << 20
    return int(min(cap * 3 // 4, 96 << 20))


# ----------------------------------------------------------------------------
# Non-depthwise path: fully fused fiber-Linear + 'tsoi,bsi->bto' contraction
# ----------------------------------------------------------------------------
def _plan_fused(T, S, A, I, O, B, itemsize):
    """Pick (t_tile, ts, Spad, i_tile, Opad) from a VMEM budget."""
    Opad = _round_up(max(O, 1), _LANE)
    t_tile = max(1, min(8, (T + 1) // 2))        # parallel T-grid extent >= 2 when T > 1
    i_tile = _largest_divisor_leq(I, 4)
    Spad = _round_up(S, _SUBLANE)

    def usage(tt, ts, it):
        e_b = 2 * tt * ts * A * itemsize          # double-buffered edge_attr block
        w_b = 2 * it * Opad * A * itemsize        # weight slab for i_tile channels
        x_b = 2 * it * B * ts * itemsize
        b_b = 2 * tt * Opad * 4
        acc_b = B * tt * Opad * 4                 # f32 accumulator scratch
        out_b = 2 * B * tt * Opad * 4             # double-buffered output block
        return e_b + w_b + x_b + b_b + acc_b + out_b

    ts = Spad
    if usage(t_tile, ts, i_tile) > _VMEM_TILE_BUDGET and Spad > _LANE:
        # Tile the source axis (multiples of 128 so the x-block's lane dim is legal).
        ts = _round_up(Spad, _LANE)
        while ts > _LANE and usage(t_tile, ts, i_tile) > _VMEM_TILE_BUDGET:
            ts = max(_LANE, _round_up(ts // 2, _LANE))
        Spad = _round_up(S, ts)
    while t_tile > 1 and usage(t_tile, ts, i_tile) > _VMEM_TILE_BUDGET:
        t_tile = max(1, t_tile // 2)
    while i_tile > 1 and usage(t_tile, ts, i_tile) > _VMEM_TILE_BUDGET:
        i_tile = _largest_divisor_leq(I, i_tile - 1)
    # TODO(synk): additionally tile O / B if a single (B, Opad) column block still
    # exceeds the budget for extremely wide channel counts.
    return t_tile, ts, Spad, i_tile, Opad


def _fused_fiberconv_kernel(e_ref, w_ref, x_ref, b_ref, o_ref, acc_ref,
                            *, t_tile, ts, i_tile, opad):
    s_idx = pl.program_id(1)
    i_idx = pl.program_id(2)

    @pl.when((s_idx == 0) & (i_idx == 0))
    def _init():
        acc_ref[...] = jnp.zeros_like(acc_ref)

    e = e_ref[...]                                # (t_tile, ts, A)
    a_dim = e.shape[-1]
    e2 = e.reshape(t_tile * ts, a_dim)            # free: leading-dim merge (ts % 8 == 0)

    for ii in range(i_tile):                      # static unroll, i_tile <= 4
        w_i = w_ref[ii]                           # (Opad, A)  weight rows for channel i
        x_i = x_ref[ii]                           # (B, ts)    x[:, s-window, i]
        # Fiber kernel for channel i and EVERY target in the tile: one MXU matmul,
        # contracting the weight's last dim (trans_b -> no transposed weight copy).
        kf = lax.dot_general(
            e2, w_i,
            dimension_numbers=(((1,), (1,)), ((), ())),
            preferred_element_type=jnp.float32)   # (t_tile*ts, Opad)
        for tt in range(t_tile):
            part = jnp.dot(x_i, kf[tt * ts:(tt + 1) * ts, :],
                           preferred_element_type=jnp.float32)    # (B, Opad)
            acc_ref[:, tt * opad:(tt + 1) * opad] += part

    @pl.when((s_idx == pl.num_programs(1) - 1) & (i_idx == pl.num_programs(2) - 1))
    def _finalize():
        o_ref[...] = (acc_ref[...] + b_ref[...]).astype(o_ref.dtype)


def fiber_conv_nondepthwise(x, edge_attr, weight, bias_vec, *, in_dim, out_dim):
    """x: (B,S,I), edge_attr: (T,S,A), weight: (O*I, A) torch layout -> (B,T,O) f32."""
    B, S, I = x.shape
    T, S2, A = edge_attr.shape
    assert S2 == S and I == in_dim and weight.shape == (out_dim * in_dim, A)
    O = out_dim
    itemsize = max(jnp.dtype(x.dtype).itemsize, jnp.dtype(edge_attr.dtype).itemsize)
    t_tile, ts, Spad, i_tile, Opad = _plan_fused(T, S, A, I, O, B, itemsize)
    Tp = _round_up(T, t_tile)

    # Wrapper-side layout prep touches only the SMALL operands; the big (T*S, I*O)
    # fiber-kernel intermediate never exists in HBM any more.
    e_p = jnp.pad(edge_attr, ((0, Tp - T), (0, Spad - S), (0, 0)))
    # Weight rows regrouped once: w3[i, o, a] = weight[o*I + i, a]; O zero-padded to
    # a lane-dense multiple of 128.
    w3 = weight.reshape(O, I, A).transpose(1, 0, 2)
    w3 = jnp.pad(w3, ((0, 0), (0, Opad - O), (0, 0)))
    # x laid out channel-major so each (channel, source-window) slab is a clean
    # (B, ts) block.  x is small; this is the only wrapper transpose left.
    x3 = jnp.pad(x, ((0, 0), (0, Spad - S), (0, 0))).transpose(2, 0, 1)
    # Bias pre-tiled across the target tile; added exactly once at finalize.
    b_pad = jnp.zeros((Opad,), jnp.float32).at[:O].set(bias_vec.astype(jnp.float32))
    b_tiled = jnp.tile(b_pad, (t_tile,)).reshape(1, t_tile * Opad)

    grid = (Tp // t_tile, Spad // ts, I // i_tile)
    kernel = functools.partial(_fused_fiberconv_kernel,
                               t_tile=t_tile, ts=ts, i_tile=i_tile, opad=Opad)
    out2d = pl.pallas_call(
        kernel,
        out_shape=jax.ShapeDtypeStruct((B, Tp * Opad), jnp.float32),
        grid_spec=pltpu.PrefetchScalarGridSpec(
            num_scalar_prefetch=0,
            grid=grid,
            in_specs=[
                pl.BlockSpec((t_tile, ts, A), lambda t, s, i: (t, s, 0)),
                pl.BlockSpec((i_tile, Opad, A), lambda t, s, i: (i, 0, 0)),
                pl.BlockSpec((i_tile, B, ts), lambda t, s, i: (i, 0, s)),
                pl.BlockSpec((1, t_tile * Opad), lambda t, s, i: (0, 0)),
            ],
            out_specs=pl.BlockSpec((B, t_tile * Opad), lambda t, s, i: (0, t)),
            scratch_shapes=[pltpu.VMEM((B, t_tile * Opad), jnp.float32)],
        ),
        compiler_params=pltpu.CompilerParams(
            dimension_semantics=("parallel", "arbitrary", "arbitrary"),
            vmem_limit_bytes=_vmem_limit_bytes()),
    )(e_p, w3, x3, b_tiled)
    return out2d.reshape(B, Tp, Opad)[:, :T, :O]


# ----------------------------------------------------------------------------
# Depthwise path: fused fiber-Linear + 'tso,bso->bto' (fiber kernel stays in VMEM)
# ----------------------------------------------------------------------------
def _plan_depthwise(T, S, A, O, B, itemsize):
    Opad = _round_up(max(O, 1), _LANE)
    t_tile = max(1, min(8, (T + 1) // 2))
    Spad = _round_up(S, _SUBLANE)

    def usage(tt, ts):
        e_b = 2 * tt * ts * A * itemsize
        w_b = 2 * Opad * A * itemsize
        x_b = 2 * B * ts * Opad * itemsize
        b_b = 2 * tt * Opad * 4
        acc_b = B * tt * Opad * 4
        out_b = 2 * B * tt * Opad * 4
        return e_b + w_b + x_b + b_b + acc_b + out_b

    ts = Spad
    if usage(t_tile, ts) > _VMEM_TILE_BUDGET and Spad > _SUBLANE:
        while ts > _SUBLANE and usage(t_tile, ts) > _VMEM_TILE_BUDGET:
            ts = max(_SUBLANE, _round_up(ts // 2, _SUBLANE))
        Spad = _round_up(S, ts)
    while t_tile > 1 and usage(t_tile, ts) > _VMEM_TILE_BUDGET:
        t_tile = max(1, t_tile // 2)
    return t_tile, ts, Spad, Opad


def _depthwise_fiberconv_kernel(e_ref, w_ref, x_ref, b_ref, o_ref, acc_ref,
                                *, t_tile, ts, opad):
    s_idx = pl.program_id(1)

    @pl.when(s_idx == 0)
    def _init():
        acc_ref[...] = jnp.zeros_like(acc_ref)

    e = e_ref[...]                                # (t_tile, ts, A)
    a_dim = e.shape[-1]
    w = w_ref[...]                                # (Opad, A)  resident (constant index)
    x = x_ref[...].astype(jnp.float32)            # (B, ts, Opad)

    # Fiber kernels of the WHOLE target tile with one batched MXU matmul.
    kf = lax.dot_general(
        e.reshape(t_tile * ts, a_dim), w,
        dimension_numbers=(((1,), (1,)), ((), ())),
        preferred_element_type=jnp.float32)       # (t_tile*ts, Opad)

    for tt in range(t_tile):
        kft = kf[tt * ts:(tt + 1) * ts, :]        # (ts, Opad)
        # elementwise product + sublane reduce (VPU + XLU), accumulated per target
        acc_ref[:, tt * opad:(tt + 1) * opad] += jnp.sum(x * kft[None, :, :], axis=1)

    @pl.when(s_idx == pl.num_programs(1) - 1)
    def _finalize():
        o_ref[...] = (acc_ref[...] + b_ref[...]).astype(o_ref.dtype)


def fiber_conv_depthwise(x, edge_attr, weight, bias_vec):
    """x: (B,S,O), edge_attr: (T,S,A), weight: (O, A) -> (B,T,O) f32."""
    B, S, O = x.shape
    T, S2, A = edge_attr.shape
    assert S2 == S and weight.shape == (O, A)
    itemsize = max(jnp.dtype(x.dtype).itemsize, jnp.dtype(edge_attr.dtype).itemsize)
    t_tile, ts, Spad, Opad = _plan_depthwise(T, S, A, O, B, itemsize)
    Tp = _round_up(T, t_tile)

    e_p = jnp.pad(edge_attr, ((0, Tp - T), (0, Spad - S), (0, 0)))
    w_p = jnp.pad(weight, ((0, Opad - O), (0, 0)))
    x_p = jnp.pad(x, ((0, 0), (0, Spad - S), (0, Opad - O)))
    b_pad = jnp.zeros((Opad,), jnp.float32).at[:O].set(bias_vec.astype(jnp.float32))
    b_tiled = jnp.tile(b_pad, (t_tile,)).reshape(1, t_tile * Opad)

    grid = (Tp // t_tile, Spad // ts)
    kernel = functools.partial(_depthwise_fiberconv_kernel,
                               t_tile=t_tile, ts=ts, opad=Opad)
    out2d = pl.pallas_call(
        kernel,
        out_shape=jax.ShapeDtypeStruct((B, Tp * Opad), jnp.float32),
        grid_spec=pltpu.PrefetchScalarGridSpec(
            num_scalar_prefetch=0,
            grid=grid,
            in_specs=[
                pl.BlockSpec((t_tile, ts, A), lambda t, s: (t, s, 0)),
                pl.BlockSpec((Opad, A), lambda t, s: (0, 0)),
                pl.BlockSpec((B, ts, Opad), lambda t, s: (0, s, 0)),
                pl.BlockSpec((1, t_tile * Opad), lambda t, s: (0, 0)),
            ],
            out_specs=pl.BlockSpec((B, t_tile * Opad), lambda t, s: (0, t)),
            scratch_shapes=[pltpu.VMEM((B, t_tile * Opad), jnp.float32)],
        ),
        compiler_params=pltpu.CompilerParams(
            dimension_semantics=("parallel", "arbitrary"),
            vmem_limit_bytes=_vmem_limit_bytes()),
    )(e_p, w_p, x_p, b_tiled)
    return out2d.reshape(B, Tp, Opad)[:, :T, :O]


# ----------------------------------------------------------------------------
# FiberConv forward
# ----------------------------------------------------------------------------
def fiber_conv_forward(x, edge_attr_fiber, weight, bias, *, in_dim, out_dim,
                       depthwise=False):
    """
    x:               (B, S, in_dim)
    edge_attr_fiber: (T, S, attr_dim)
    weight:          torch.nn.Linear layout: (out_dim*in_dim, attr_dim)
                     or (in_dim, attr_dim) if depthwise
    bias:            (out_dim,) or None
    returns:         (B, T, out_dim) float32
    """
    B, S, I = x.shape
    T, S2, A = edge_attr_fiber.shape
    assert S == S2 and I == in_dim
    b_vec = (jnp.zeros((out_dim,), jnp.float32) if bias is None
             else bias.astype(jnp.float32))
    if depthwise:
        assert in_dim == out_dim and weight.shape == (in_dim, A)
        return fiber_conv_depthwise(x, edge_attr_fiber, weight, b_vec)
    return fiber_conv_nondepthwise(x, edge_attr_fiber, weight, b_vec,
                                   in_dim=in_dim, out_dim=out_dim)


# ----------------------------------------------------------------------------
# Pure-JAX reference (mirrors the PyTorch module exactly)
# ----------------------------------------------------------------------------
def fiber_conv_reference(x, edge_attr_fiber, weight, bias, *, in_dim, out_dim,
                         depthwise=False):
    hi = jax.lax.Precision.HIGHEST
    kf = jnp.einsum('tsa,na->tsn', edge_attr_fiber, weight, precision=hi)
    if depthwise:
        out = jnp.einsum('tso,bso->bto', kf, x, precision=hi) * 1.0
    else:
        T, S, _ = edge_attr_fiber.shape
        kf = kf.reshape(T, S, out_dim, in_dim)
        out = jnp.einsum('tsoi,bsi->bto', kf, x, precision=hi) * 1.0
    if bias is not None:
        out = out + bias
    return out


# ----------------------------------------------------------------------------
# Demo / check
# ----------------------------------------------------------------------------
if __name__ == "__main__":
    key = jax.random.PRNGKey(0)
    k1, k2, k3, k4, k5, k6 = jax.random.split(key, 6)

    # --- non-depthwise, deliberately awkward dims (odd O/I/A, T/S not multiples
    # --- of tile sizes) so every padding path is exercised ---
    B, T, S = 2, 12, 10
    in_dim, out_dim, attr_dim = 6, 5, 7
    x = jax.random.normal(k1, (B, S, in_dim), jnp.float32)
    edge_attr = jax.random.normal(k2, (T, S, attr_dim), jnp.float32)
    bound = 1.0 / math.sqrt(attr_dim)
    w_full = jax.random.uniform(k3, (out_dim * in_dim, attr_dim), jnp.float32,
                                -bound, bound)
    bias = 0.1 * jax.random.normal(k4, (out_dim,), jnp.float32)

    out = jax.block_until_ready(
        fiber_conv_forward(x, edge_attr, w_full, bias,
                           in_dim=in_dim, out_dim=out_dim, depthwise=False))
    ref = fiber_conv_reference(x, edge_attr, w_full, bias,
                               in_dim=in_dim, out_dim=out_dim, depthwise=False)
    assert out.shape == (B, T, out_dim)
    assert jnp.allclose(out, ref, atol=1e-3, rtol=1e-3), \
        float(jnp.max(jnp.abs(out - ref)))

    # --- bias=None path ---
    out_nb = jax.block_until_ready(
        fiber_conv_forward(x, edge_attr, w_full, None,
                           in_dim=in_dim, out_dim=out_dim, depthwise=False))
    ref_nb = fiber_conv_reference(x, edge_attr, w_full, None,
                                  in_dim=in_dim, out_dim=out_dim, depthwise=False)
    assert jnp.allclose(out_nb, ref_nb, atol=1e-3, rtol=1e-3)

    # --- depthwise path ---
    Bd, Td, Sd, dd, ad = 3, 9, 11, 6, 7
    xd = jax.random.normal(k5, (Bd, Sd, dd), jnp.float32)
    ed = jax.random.normal(k6, (Td, Sd, ad), jnp.float32)
    wd = jax.random.uniform(k3, (dd, ad), jnp.float32,
                            -1.0 / math.sqrt(ad), 1.0 / math.sqrt(ad))
    bd = jnp.zeros((dd,), jnp.float32)
    out_dw = jax.block_until_ready(
        fiber_conv_forward(xd, ed, wd, bd, in_dim=dd, out_dim=dd, depthwise=True))
    ref_dw = fiber_conv_reference(xd, ed, wd, bd, in_dim=dd, out_dim=dd,
                                  depthwise=True)
    assert out_dw.shape == (Bd, Td, dd)
    assert jnp.allclose(out_dw, ref_dw, atol=1e-3, rtol=1e-3)

    print("KERNEL_OK")
</pallas_src>

<mosaic_0001>
module attributes {stable_mosaic.version = 11 : i64} {
  func.func @_fused_fiberconv_kernel(%arg0: i32, %arg1: i32, %arg2: i32, %arg3: memref<6x16x7xf32, #tpu.memory_space<vmem>>, %arg4: memref<3x128x7xf32, #tpu.memory_space<vmem>>, %arg5: memref<3x2x16xf32, #tpu.memory_space<vmem>>, %arg6: memref<1x768xf32, #tpu.memory_space<vmem>>, %arg7: memref<2x768xf32, #tpu.memory_space<vmem>>, %arg8: memref<2x768xf32, #tpu.memory_space<vmem>>) attributes {dimension_semantics = [#tpu.dimension_semantics<parallel>, #tpu.dimension_semantics<arbitrary>, #tpu.dimension_semantics<arbitrary>], iteration_bounds = array<i64: 2, 1, 2>, scalar_prefetch = 0 : i64, scratch_operands = 1 : i64, tpu.core_type = #tpu.core_type<tc>, window_params = [{transform_indices = @transform_0, window_bounds = array<i64: 6, 16, 7>}, {transform_indices = @transform_1, window_bounds = array<i64: 3, 128, 7>}, {transform_indices = @transform_2, window_bounds = array<i64: 3, 2, 16>}, {pipeline_mode = #tpu.pipeline_mode<synchronous>, transform_indices = @transform_3, window_bounds = array<i64: 1, 768>}, {transform_indices = @transform_4, window_bounds = array<i64: 2, 768>}]} {
    %c0_i32 = arith.constant 0 : i32
    %0 = arith.cmpi eq, %arg1, %c0_i32 : i32
    %c0_i32_0 = arith.constant 0 : i32
    %1 = arith.cmpi eq, %arg2, %c0_i32_0 : i32
    %2 = arith.andi %0, %1 : i1
    %3 = arith.extui %2 : i1 to i32
    %c0_i32_1 = arith.constant 0 : i32
    %4 = arith.cmpi ne, %3, %c0_i32_1 : i32
    scf.if %4 {
      %cst_109 = arith.constant 0.000000e+00 : f32
      %117 = vector.broadcast %cst_109 : f32 to vector<2x768xf32>
      %c0_110 = arith.constant 0 : index
      %c0_111 = arith.constant 0 : index
      %118 = vector.load %arg8[%c0_110, %c0_111] : memref<2x768xf32, #tpu.memory_space<vmem>>, vector<2x768xf32>
      tpu.vector_store %arg8[%c0_110, %c0_111], %117 {strides = array<i32>} : memref<2x768xf32, #tpu.memory_space<vmem>>, vector<2x768xf32>,
    } else {
    }
    %c0 = arith.constant 0 : index
    %c0_2 = arith.constant 0 : index
    %c0_3 = arith.constant 0 : index
    %5 = vector.load %arg3[%c0, %c0_2, %c0_3] : memref<6x16x7xf32, #tpu.memory_space<vmem>>, vector<6x16x7xf32>
    %6 = vector.shape_cast %5 : vector<6x16x7xf32> to vector<96x7xf32>
    %c0_4 = arith.constant 0 : index
    %c0_5 = arith.constant 0 : index
    %c0_6 = arith.constant 0 : index
    %7 = vector.load %arg4[%c0_4, %c0_5, %c0_6] : memref<3x128x7xf32, #tpu.memory_space<vmem>>, vector<1x128x7xf32>
    %8 = vector.shape_cast %7 : vector<1x128x7xf32> to vector<128x7xf32>
    %c0_7 = arith.constant 0 : index
    %c0_8 = arith.constant 0 : index
    %c0_9 = arith.constant 0 : index
    %9 = vector.load %arg5[%c0_7, %c0_8, %c0_9] : memref<3x2x16xf32, #tpu.memory_space<vmem>>, vector<1x2x16xf32>
    %10 = vector.shape_cast %9 : vector<1x2x16xf32> to vector<2x16xf32>
    %cst = arith.constant dense<0.000000e+00> : vector<96x128xf32>
    %11 = tpu.matmul %6, %8, %cst {dimension_numbers = #tpu.dot_dimension_numbers<[1], [1], [0], [0], [0, 0, 1, 0], [], []>} : vector<96x7xf32>, vector<128x7xf32>, vector<96x128xf32> -> vector<96x128xf32>
    %12 = vector.extract_strided_slice %11 {offsets = [0, 0], sizes = [16, 128], strides = [1, 1]} : vector<96x128xf32> to vector<16x128xf32>
    %cst_10 = arith.constant dense<0.000000e+00> : vector<2x128xf32>
    %13 = tpu.matmul %10, %12, %cst_10 {dimension_numbers = #tpu.dot_dimension_numbers<[1], [0], [0], [1], [0, 0, 1, 1], [], []>} : vector<2x16xf32>, vector<16x128xf32>, vector<2x128xf32> -> vector<2x128xf32>
    %c0_11 = arith.constant 0 : index
    %c0_12 = arith.constant 0 : index
    %14 = vector.load %arg8[%c0_11, %c0_12] : memref<2x768xf32, #tpu.memory_space<vmem>>, vector<2x128xf32>
    %15 = arith.addf %14, %13 : vector<2x128xf32>
    %c0_13 = arith.constant 0 : index
    %c0_14 = arith.constant 0 : index
    %16 = vector.load %arg8[%c0_13, %c0_14] : memref<2x768xf32, #tpu.memory_space<vmem>>, vector<2x128xf32>
    tpu.vector_store %arg8[%c0_13, %c0_14], %15 {strides = array<i32>} : memref<2x768xf32, #tpu.memory_space<vmem>>, vector<2x128xf32>,
    %17 = vector.extract_strided_slice %11 {offsets = [16, 0], sizes = [16, 128], strides = [1, 1]} : vector<96x128xf32> to vector<16x128xf32>
    %cst_15 = arith.constant dense<0.000000e+00> : vector<2x128xf32>
    %18 = tpu.matmul %10, %17, %cst_15 {dimension_numbers = #tpu.dot_dimension_numbers<[1], [0], [0], [1], [0, 0, 1, 1], [], []>} : vector<2x16xf32>, vector<16x128xf32>, vector<2x128xf32> -> vector<2x128xf32>
    %c0_16 = arith.constant 0 : index
    %c128 = arith.constant 128 : index
    %19 = vector.load %arg8[%c0_16, %c128] : memref<2x768xf32, #tpu.memory_space<vmem>>, vector<2x128xf32>
    %20 = arith.addf %19, %18 : vector<2x128xf32>
    %c0_17 = arith.constant 0 : index
    %c128_18 = arith.constant 128 : index
    %21 = vector.load %arg8[%c0_17, %c128_18] : memref<2x768xf32, #tpu.memory_space<vmem>>, vector<2x128xf32>
    tpu.vector_store %arg8[%c0_17, %c128_18], %20 {strides = array<i32>} : memref<2x768xf32, #tpu.memory_space<vmem>>, vector<2x128xf32>,
    %22 = vector.extract_strided_slice %11 {offsets = [32, 0], sizes = [16, 128], strides = [1, 1]} : vector<96x128xf32> to vector<16x128xf32>
    %cst_19 = arith.constant dense<0.000000e+00> : vector<2x128xf32>
    %23 = tpu.matmul %10, %22, %cst_19 {dimension_numbers = #tpu.dot_dimension_numbers<[1], [0], [0], [1], [0, 0, 1, 1], [], []>} : vector<2x16xf32>, vector<16x128xf32>, vector<2x128xf32> -> vector<2x128xf32>
    %c0_20 = arith.constant 0 : index
    %c256 = arith.constant 256 : index
    %24 = vector.load %arg8[%c0_20, %c256] : memref<2x768xf32, #tpu.memory_space<vmem>>, vector<2x128xf32>
    %25 = arith.addf %24, %23 : vector<2x128xf32>
    %c0_21 = arith.constant 0 : index
    %c256_22 = arith.constant 256 : index
    %26 = vector.load %arg8[%c0_21, %c256_22] : memref<2x768xf32, #tpu.memory_space<vmem>>, vector<2x128xf32>
    tpu.vector_store %arg8[%c0_21, %c256_22], %25 {strides = array<i32>} : memref<2x768xf32, #tpu.memory_space<vmem>>, vector<2x128xf32>,
    %27 = vector.extract_strided_slice %11 {offsets = [48, 0], sizes = [16, 128], strides = [1, 1]} : vector<96x128xf32> to vector<16x128xf32>
    %cst_23 = arith.constant dense<0.000000e+00> : vector<2x128xf32>
    %28 = tpu.matmul %10, %27, %cst_23 {dimension_numbers = #tpu.dot_dimension_numbers<[1], [0], [0], [1], [0, 0, 1, 1], [], []>} : vector<2x16xf32>, vector<16x128xf32>, vector<2x128xf32> -> vector<2x128xf32>
    %c0_24 = arith.constant 0 : index
    %c384 = arith.constant 384 : index
    %29 = vector.load %arg8[%c0_24, %c384] : memref<2x768xf32, #tpu.memory_space<vmem>>, vector<2x128xf32>
    %30 = arith.addf %29, %28 : vector<2x128xf32>
    %c0_25 = arith.constant 0 : index
    %c384_26 = arith.constant 384 : index
    %31 = vector.load %arg8[%c0_25, %c384_26] : memref<2x768xf32, #tpu.memory_space<vmem>>, vector<2x128xf32>
    tpu.vector_store %arg8[%c0_25, %c384_26], %30 {strides = array<i32>} : memref<2x768xf32, #tpu.memory_space<vmem>>, vector<2x128xf32>,
    %32 = vector.extract_strided_slice %11 {offsets = [64, 0], sizes = [16, 128], strides = [1, 1]} : vector<96x128xf32> to vector<16x128xf32>
    %cst_27 = arith.constant dense<0.000000e+00> : vector<2x128xf32>
    %33 = tpu.matmul %10, %32, %cst_27 {dimension_numbers = #tpu.dot_dimension_numbers<[1], [0], [0], [1], [0, 0, 1, 1], [], []>} : vector<2x16xf32>, vector<16x128xf32>, vector<2x128xf32> -> vector<2x128xf32>
    %c0_28 = arith.constant 0 : index
    %c512 = arith.constant 512 : index
    %34 = vector.load %arg8[%c0_28, %c512] : memref<2x768xf32, #tpu.memory_space<vmem>>, vector<2x128xf32>
    %35 = arith.addf %34, %33 : vector<2x128xf32>
    %c0_29 = arith.constant 0 : index
    %c512_30 = arith.constant 512 : index
    %36 = vector.load %arg8[%c0_29, %c512_30] : memref<2x768xf32, #tpu.memory_space<vmem>>, vector<2x128xf32>
    tpu.vector_store %arg8[%c0_29, %c512_30], %35 {strides = array<i32>} : memref<2x768xf32, #tpu.memory_space<vmem>>, vector<2x128xf32>,
    %37 = vector.extract_strided_slice %11 {offsets = [80, 0], sizes = [16, 128], strides = [1, 1]} : vector<96x128xf32> to vector<16x128xf32>
    %cst_31 = arith.constant dense<0.000000e+00> : vector<2x128xf32>
    %38 = tpu.matmul %10, %37, %cst_31 {dimension_numbers = #tpu.dot_dimension_numbers<[1], [0], [0], [1], [0, 0, 1, 1], [], []>} : vector<2x16xf32>, vector<16x128xf32>, vector<2x128xf32> -> vector<2x128xf32>
    %c0_32 = arith.constant 0 : index
    %c640 = arith.constant 640 : index
    %39 = vector.load %arg8[%c0_32, %c640] : memref<2x768xf32, #tpu.memory_space<vmem>>, vector<2x128xf32>
    %40 = arith.addf %39, %38 : vector<2x128xf32>
    %c0_33 = arith.constant 0 : index
    %c640_34 = arith.constant 640 : index
    %41 = vector.load %arg8[%c0_33, %c640_34] : memref<2x768xf32, #tpu.memory_space<vmem>>, vector<2x128xf32>
    tpu.vector_store %arg8[%c0_33, %c640_34], %40 {strides = array<i32>} : memref<2x768xf32, #tpu.memory_space<vmem>>, vector<2x128xf32>,
    %c1 = arith.constant 1 : index
    %c0_35 = arith.constant 0 : index
    %c0_36 = arith.constant 0 : index
    %42 = vector.load %arg4[%c1, %c0_35, %c0_36] : memref<3x128x7xf32, #tpu.memory_space<vmem>>, vector<1x128x7xf32>
    %43 = vector.shape_cast %42 : vector<1x128x7xf32> to vector<128x7xf32>
    %c1_37 = arith.constant 1 : index
    %c0_38 = arith.constant 0 : index
    %c0_39 = arith.constant 0 : index
    %44 = vector.load %arg5[%c1_37, %c0_38, %c0_39] : memref<3x2x16xf32, #tpu.memory_space<vmem>>, vector<1x2x16xf32>
    %45 = vector.shape_cast %44 : vector<1x2x16xf32> to vector<2x16xf32>
    %cst_40 = arith.constant dense<0.000000e+00> : vector<96x128xf32>
    %46 = tpu.matmul %6, %43, %cst_40 {dimension_numbers = #tpu.dot_dimension_numbers<[1], [1], [0], [0], [0, 0, 1, 0], [], []>} : vector<96x7xf32>, vector<128x7xf32>, vector<96x128xf32> -> vector<96x128xf32>
    %47 = vector.extract_strided_slice %46 {offsets = [0, 0], sizes = [16, 128], strides = [1, 1]} : vector<96x128xf32> to vector<16x128xf32>
    %cst_41 = arith.constant dense<0.000000e+00> : vector<2x128xf32>
    %48 = tpu.matmul %45, %47, %cst_41 {dimension_numbers = #tpu.dot_dimension_numbers<[1], [0], [0], [1], [0, 0, 1, 1], [], []>} : vector<2x16xf32>, vector<16x128xf32>, vector<2x128xf32> -> vector<2x128xf32>
    %c0_42 = arith.constant 0 : index
    %c0_43 = arith.constant 0 : index
    %49 = vector.load %arg8[%c0_42, %c0_43] : memref<2x768xf32, #tpu.memory_space<vmem>>, vector<2x128xf32>
    %50 = arith.addf %49, %48 : vector<2x128xf32>
    %c0_44 = arith.constant 0 : index
    %c0_45 = arith.constant 0 : index
    %51 = vector.load %arg8[%c0_44, %c0_45] : memref<2x768xf32, #tpu.memory_space<vmem>>, vector<2x128xf32>
    tpu.vector_store %arg8[%c0_44, %c0_45], %50 {strides = array<i32>} : memref<2x768xf32, #tpu.memory_space<vmem>>, vector<2x128xf32>,
    %52 = vector.extract_strided_slice %46 {offsets = [16, 0], sizes = [16, 128], strides = [1, 1]} : vector<96x128xf32> to vector<16x128xf32>
    %cst_46 = arith.constant dense<0.000000e+00> : vector<2x128xf32>
    %53 = tpu.matmul %45, %52, %cst_46 {dimension_numbers = #tpu.dot_dimension_numbers<[1], [0], [0], [1], [0, 0, 1, 1], [], []>} : vector<2x16xf32>, vector<16x128xf32>, vector<2x128xf32> -> vector<2x128xf32>
    %c0_47 = arith.constant 0 : index
    %c128_48 = arith.constant 128 : index
    %54 = vector.load %arg8[%c0_47, %c128_48] : memref<2x768xf32, #tpu.memory_space<vmem>>, vector<2x128xf32>
    %55 = arith.addf %54, %53 : vector<2x128xf32>
    %c0_49 = arith.constant 0 : index
    %c128_50 = arith.constant 128 : index
    %56 = vector.load %arg8[%c0_49, %c128_50] : memref<2x768xf32, #tpu.memory_space<vmem>>, vector<2x128xf32>
    tpu.vector_store %arg8[%c0_49, %c128_50], %55 {strides = array<i32>} : memref<2x768xf32, #tpu.memory_space<vmem>>, vector<2x128xf32>,
    %57 = vector.extract_strided_slice %46 {offsets = [32, 0], sizes = [16, 128], strides = [1, 1]} : vector<96x128xf32> to vector<16x128xf32>
    %cst_51 = arith.constant dense<0.000000e+00> : vector<2x128xf32>
    %58 = tpu.matmul %45, %57, %cst_51 {dimension_numbers = #tpu.dot_dimension_numbers<[1], [0], [0], [1], [0, 0, 1, 1], [], []>} : vector<2x16xf32>, vector<16x128xf32>, vector<2x128xf32> -> vector<2x128xf32>
    %c0_52 = arith.constant 0 : index
    %c256_53 = arith.constant 256 : index
    %59 = vector.load %arg8[%c0_52, %c256_53] : memref<2x768xf32, #tpu.memory_space<vmem>>, vector<2x128xf32>
    %60 = arith.addf %59, %58 : vector<2x128xf32>
    %c0_54 = arith.constant 0 : index
    %c256_55 = arith.constant 256 : index
    %61 = vector.load %arg8[%c0_54, %c256_55] : memref<2x768xf32, #tpu.memory_space<vmem>>, vector<2x128xf32>
    tpu.vector_store %arg8[%c0_54, %c256_55], %60 {strides = array<i32>} : memref<2x768xf32, #tpu.memory_space<vmem>>, vector<2x128xf32>,
    %62 = vector.extract_strided_slice %46 {offsets = [48, 0], sizes = [16, 128], strides = [1, 1]} : vector<96x128xf32> to vector<16x128xf32>
    %cst_56 = arith.constant dense<0.000000e+00> : vector<2x128xf32>
    %63 = tpu.matmul %45, %62, %cst_56 {dimension_numbers = #tpu.dot_dimension_numbers<[1], [0], [0], [1], [0, 0, 1, 1], [], []>} : vector<2x16xf32>, vector<16x128xf32>, vector<2x128xf32> -> vector<2x128xf32>
    %c0_57 = arith.constant 0 : index
    %c384_58 = arith.constant 384 : index
    %64 = vector.load %arg8[%c0_57, %c384_58] : memref<2x768xf32, #tpu.memory_space<vmem>>, vector<2x128xf32>
    %65 = arith.addf %64, %63 : vector<2x128xf32>
    %c0_59 = arith.constant 0 : index
    %c384_60 = arith.constant 384 : index
    %66 = vector.load %arg8[%c0_59, %c384_60] : memref<2x768xf32, #tpu.memory_space<vmem>>, vector<2x128xf32>
    tpu.vector_store %arg8[%c0_59, %c384_60], %65 {strides = array<i32>} : memref<2x768xf32, #tpu.memory_space<vmem>>, vector<2x128xf32>,
    %67 = vector.extract_strided_slice %46 {offsets = [64, 0], sizes = [16, 128], strides = [1, 1]} : vector<96x128xf32> to vector<16x128xf32>
    %cst_61 = arith.constant dense<0.000000e+00> : vector<2x128xf32>
    %68 = tpu.matmul %45, %67, %cst_61 {dimension_numbers = #tpu.dot_dimension_numbers<[1], [0], [0], [1], [0, 0, 1, 1], [], []>} : vector<2x16xf32>, vector<16x128xf32>, vector<2x128xf32> -> vector<2x128xf32>
    %c0_62 = arith.constant 0 : index
    %c512_63 = arith.constant 512 : index
    %69 = vector.load %arg8[%c0_62, %c512_63] : memref<2x768xf32, #tpu.memory_space<vmem>>, vector<2x128xf32>
    %70 = arith.addf %69, %68 : vector<2x128xf32>
    %c0_64 = arith.constant 0 : index
    %c512_65 = arith.constant 512 : index
    %71 = vector.load %arg8[%c0_64, %c512_65] : memref<2x768xf32, #tpu.memory_space<vmem>>, vector<2x128xf32>
    tpu.vector_store %arg8[%c0_64, %c512_65], %70 {strides = array<i32>} : memref<2x768xf32, #tpu.memory_space<vmem>>, vector<2x128xf32>,
    %72 = vector.extract_strided_slice %46 {offsets = [80, 0], sizes = [16, 128], strides = [1, 1]} : vector<96x128xf32> to vector<16x128xf32>
    %cst_66 = arith.constant dense<0.000000e+00> : vector<2x128xf32>
    %73 = tpu.matmul %45, %72, %cst_66 {dimension_numbers = #tpu.dot_dimension_numbers<[1], [0], [0], [1], [0, 0, 1, 1], [], []>} : vector<2x16xf32>, vector<16x128xf32>, vector<2x128xf32> -> vector<2x128xf32>
    %c0_67 = arith.constant 0 : index
    %c640_68 = arith.constant 640 : index
    %74 = vector.load %arg8[%c0_67, %c640_68] : memref<2x768xf32, #tpu.memory_space<vmem>>, vector<2x128xf32>
    %75 = arith.addf %74, %73 : vector<2x128xf32>
    %c0_69 = arith.constant 0 : index
    %c640_70 = arith.constant 640 : index
    %76 = vector.load %arg8[%c0_69, %c640_70] : memref<2x768xf32, #tpu.memory_space<vmem>>, vector<2x128xf32>
    tpu.vector_store %arg8[%c0_69, %c640_70], %75 {strides = array<i32>} : memref<2x768xf32, #tpu.memory_space<vmem>>, vector<2x128xf32>,
    %c2 = arith.constant 2 : index
    %c0_71 = arith.constant 0 : index
    %c0_72 = arith.constant 0 : index
    %77 = vector.load %arg4[%c2, %c0_71, %c0_72] : memref<3x128x7xf32, #tpu.memory_space<vmem>>, vector<1x128x7xf32>
    %78 = vector.shape_cast %77 : vector<1x128x7xf32> to vector<128x7xf32>
    %c2_73 = arith.constant 2 : index
    %c0_74 = arith.constant 0 : index
    %c0_75 = arith.constant 0 : index
    %79 = vector.load %arg5[%c2_73, %c0_74, %c0_75] : memref<3x2x16xf32, #tpu.memory_space<vmem>>, vector<1x2x16xf32>
    %80 = vector.shape_cast %79 : vector<1x2x16xf32> to vector<2x16xf32>
    %cst_76 = arith.constant dense<0.000000e+00> : vector<96x128xf32>
    %81 = tpu.matmul %6, %78, %cst_76 {dimension_numbers = #tpu.dot_dimension_numbers<[1], [1], [0], [0], [0, 0, 1, 0], [], []>} : vector<96x7xf32>, vector<128x7xf32>, vector<96x128xf32> -> vector<96x128xf32>
    %82 = vector.extract_strided_slice %81 {offsets = [0, 0], sizes = [16, 128], strides = [1, 1]} : vector<96x128xf32> to vector<16x128xf32>
    %cst_77 = arith.constant dense<0.000000e+00> : vector<2x128xf32>
    %83 = tpu.matmul %80, %82, %cst_77 {dimension_numbers = #tpu.dot_dimension_numbers<[1], [0], [0], [1], [0, 0, 1, 1], [], []>} : vector<2x16xf32>, vector<16x128xf32>, vector<2x128xf32> -> vector<2x128xf32>
    %c0_78 = arith.constant 0 : index
    %c0_79 = arith.constant 0 : index
    %84 = vector.load %arg8[%c0_78, %c0_79] : memref<2x768xf32, #tpu.memory_space<vmem>>, vector<2x128xf32>
    %85 = arith.addf %84, %83 : vector<2x128xf32>
    %c0_80 = arith.constant 0 : index
    %c0_81 = arith.constant 0 : index
    %86 = vector.load %arg8[%c0_80, %c0_81] : memref<2x768xf32, #tpu.memory_space<vmem>>, vector<2x128xf32>
    tpu.vector_store %arg8[%c0_80, %c0_81], %85 {strides = array<i32>} : memref<2x768xf32, #tpu.memory_space<vmem>>, vector<2x128xf32>,
    %87 = vector.extract_strided_slice %81 {offsets = [16, 0], sizes = [16, 128], strides = [1, 1]} : vector<96x128xf32> to vector<16x128xf32>
    %cst_82 = arith.constant dense<0.000000e+00> : vector<2x128xf32>
    %88 = tpu.matmul %80, %87, %cst_82 {dimension_numbers = #tpu.dot_dimension_numbers<[1], [0], [0], [1], [0, 0, 1, 1], [], []>} : vector<2x16xf32>, vector<16x128xf32>, vector<2x128xf32> -> vector<2x128xf32>
    %c0_83 = arith.constant 0 : index
    %c128_84 = arith.constant 128 : index
    %89 = vector.load %arg8[%c0_83, %c128_84] : memref<2x768xf32, #tpu.memory_space<vmem>>, vector<2x128xf32>
    %90 = arith.addf %89, %88 : vector<2x128xf32>
    %c0_85 = arith.constant 0 : index
    %c128_86 = arith.constant 128 : index
    %91 = vector.load %arg8[%c0_85, %c128_86] : memref<2x768xf32, #tpu.memory_space<vmem>>, vector<2x128xf32>
    tpu.vector_store %arg8[%c0_85, %c128_86], %90 {strides = array<i32>} : memref<2x768xf32, #tpu.memory_space<vmem>>, vector<2x128xf32>,
    %92 = vector.extract_strided_slice %81 {offsets = [32, 0], sizes = [16, 128], strides = [1, 1]} : vector<96x128xf32> to vector<16x128xf32>
    %cst_87 = arith.constant dense<0.000000e+00> : vector<2x128xf32>
    %93 = tpu.matmul %80, %92, %cst_87 {dimension_numbers = #tpu.dot_dimension_numbers<[1], [0], [0], [1], [0, 0, 1, 1], [], []>} : vector<2x16xf32>, vector<16x128xf32>, vector<2x128xf32> -> vector<2x128xf32>
    %c0_88 = arith.constant 0 : index
    %c256_89 = arith.constant 256 : index
    %94 = vector.load %arg8[%c0_88, %c256_89] : memref<2x768xf32, #tpu.memory_space<vmem>>, vector<2x128xf32>
    %95 = arith.addf %94, %93 : vector<2x128xf32>
    %c0_90 = arith.constant 0 : index
    %c256_91 = arith.constant 256 : index
    %96 = vector.load %arg8[%c0_90, %c256_91] : memref<2x768xf32, #tpu.memory_space<vmem>>, vector<2x128xf32>
    tpu.vector_store %arg8[%c0_90, %c256_91], %95 {strides = array<i32>} : memref<2x768xf32, #tpu.memory_space<vmem>>, vector<2x128xf32>,
    %97 = vector.extract_strided_slice %81 {offsets = [48, 0], sizes = [16, 128], strides = [1, 1]} : vector<96x128xf32> to vector<16x128xf32>
    %cst_92 = arith.constant dense<0.000000e+00> : vector<2x128xf32>
    %98 = tpu.matmul %80, %97, %cst_92 {dimension_numbers = #tpu.dot_dimension_numbers<[1], [0], [0], [1], [0, 0, 1, 1], [], []>} : vector<2x16xf32>, vector<16x128xf32>, vector<2x128xf32> -> vector<2x128xf32>
    %c0_93 = arith.constant 0 : index
    %c384_94 = arith.constant 384 : index
    %99 = vector.load %arg8[%c0_93, %c384_94] : memref<2x768xf32, #tpu.memory_space<vmem>>, vector<2x128xf32>
    %100 = arith.addf %99, %98 : vector<2x128xf32>
    %c0_95 = arith.constant 0 : index
    %c384_96 = arith.constant 384 : index
    %101 = vector.load %arg8[%c0_95, %c384_96] : memref<2x768xf32, #tpu.memory_space<vmem>>, vector<2x128xf32>
    tpu.vector_store %arg8[%c0_95, %c384_96], %100 {strides = array<i32>} : memref<2x768xf32, #tpu.memory_space<vmem>>, vector<2x128xf32>,
    %102 = vector.extract_strided_slice %81 {offsets = [64, 0], sizes = [16, 128], strides = [1, 1]} : vector<96x128xf32> to vector<16x128xf32>
    %cst_97 = arith.constant dense<0.000000e+00> : vector<2x128xf32>
    %103 = tpu.matmul %80, %102, %cst_97 {dimension_numbers = #tpu.dot_dimension_numbers<[1], [0], [0], [1], [0, 0, 1, 1], [], []>} : vector<2x16xf32>, vector<16x128xf32>, vector<2x128xf32> -> vector<2x128xf32>
    %c0_98 = arith.constant 0 : index
    %c512_99 = arith.constant 512 : index
    %104 = vector.load %arg8[%c0_98, %c512_99] : memref<2x768xf32, #tpu.memory_space<vmem>>, vector<2x128xf32>
    %105 = arith.addf %104, %103 : vector<2x128xf32>
    %c0_100 = arith.constant 0 : index
    %c512_101 = arith.constant 512 : index
    %106 = vector.load %arg8[%c0_100, %c512_101] : memref<2x768xf32, #tpu.memory_space<vmem>>, vector<2x128xf32>
    tpu.vector_store %arg8[%c0_100, %c512_101], %105 {strides = array<i32>} : memref<2x768xf32, #tpu.memory_space<vmem>>, vector<2x128xf32>,
    %107 = vector.extract_strided_slice %81 {offsets = [80, 0], sizes = [16, 128], strides = [1, 1]} : vector<96x128xf32> to vector<16x128xf32>
    %cst_102 = arith.constant dense<0.000000e+00> : vector<2x128xf32>
    %108 = tpu.matmul %80, %107, %cst_102 {dimension_numbers = #tpu.dot_dimension_numbers<[1], [0], [0], [1], [0, 0, 1, 1], [], []>} : vector<2x16xf32>, vector<16x128xf32>, vector<2x128xf32> -> vector<2x128xf32>
    %c0_103 = arith.constant 0 : index
    %c640_104 = arith.constant 640 : index
    %109 = vector.load %arg8[%c0_103, %c640_104] : memref<2x768xf32, #tpu.memory_space<vmem>>, vector<2x128xf32>
    %110 = arith.addf %109, %108 : vector<2x128xf32>
    %c0_105 = arith.constant 0 : index
    %c640_106 = arith.constant 640 : index
    %111 = vector.load %arg8[%c0_105, %c640_106] : memref<2x768xf32, #tpu.memory_space<vmem>>, vector<2x128xf32>
    tpu.vector_store %arg8[%c0_105, %c640_106], %110 {strides = array<i32>} : memref<2x768xf32, #tpu.memory_space<vmem>>, vector<2x128xf32>,
    %c0_i32_107 = arith.constant 0 : i32
    %112 = arith.cmpi eq, %arg1, %c0_i32_107 : i32
    %c1_i32 = arith.constant 1 : i32
    %113 = arith.cmpi eq, %arg2, %c1_i32 : i32
    %114 = arith.andi %112, %113 : i1
    %115 = arith.extui %114 : i1 to i32
    %c0_i32_108 = arith.constant 0 : i32
    %116 = arith.cmpi ne, %115, %c0_i32_108 : i32
    scf.if %116 {
      %c0_109 = arith.constant 0 : index
      %c0_110 = arith.constant 0 : index
      %117 = vector.load %arg8[%c0_109, %c0_110] : memref<2x768xf32, #tpu.memory_space<vmem>>, vector<2x768xf32>
      %c0_111 = arith.constant 0 : index
      %c0_112 = arith.constant 0 : index
      %118 = vector.load %arg6[%c0_111, %c0_112] : memref<1x768xf32, #tpu.memory_space<vmem>>, vector<1x768xf32>
      %119 = vector.broadcast %118 : vector<1x768xf32> to vector<2x768xf32>
      %120 = arith.addf %117, %119 : vector<2x768xf32>
      %c0_113 = arith.constant 0 : index
      %c0_114 = arith.constant 0 : index
      %121 = vector.load %arg7[%c0_113, %c0_114] : memref<2x768xf32, #tpu.memory_space<vmem>>, vector<2x768xf32>
      tpu.vector_store %arg7[%c0_113, %c0_114], %120 {strides = array<i32>} : memref<2x768xf32, #tpu.memory_space<vmem>>, vector<2x768xf32>,
    } else {
    }
    return
  }
  func.func @transform_0(%arg0: i32, %arg1: i32, %arg2: i32) -> (i32, i32, i32) {
    %c0_i32 = arith.constant 0 : i32
    %c0_i32_0 = arith.constant 0 : i32
    return %arg0, %arg1, %c0_i32 : i32, i32, i32
  }
  func.func @transform_1(%arg0: i32, %arg1: i32, %arg2: i32) -> (i32, i32, i32) {
    %c0_i32 = arith.constant 0 : i32
    %c0_i32_0 = arith.constant 0 : i32
    %c0_i32_1 = arith.constant 0 : i32
    return %arg2, %c0_i32, %c0_i32_0 : i32, i32, i32
  }
  func.func @transform_2(%arg0: i32, %arg1: i32, %arg2: i32) -> (i32, i32, i32) {
    %c0_i32 = arith.constant 0 : i32
    %c0_i32_0 = arith.constant 0 : i32
    return %arg2, %c0_i32, %arg1 : i32, i32, i32
  }
  func.func @transform_3(%arg0: i32, %arg1: i32, %arg2: i32) -> (i32, i32) {
    %c0_i32 = arith.constant 0 : i32
    %c0_i32_0 = arith.constant 0 : i32
    %c0_i32_1 = arith.constant 0 : i32
    return %c0_i32, %c0_i32_0 : i32, i32
  }
  func.func @transform_4(%arg0: i32, %arg1: i32, %arg2: i32) -> (i32, i32) {
    %c0_i32 = arith.constant 0 : i32
    %c0_i32_0 = arith.constant 0 : i32
    return %c0_i32, %arg0 : i32, i32
  }
}

</mosaic_0001>

<llo_original>
// kernel: tpu_custom_call.1
$region0: #{tpu_custom_call.1}
  #allocation0 [shape = 'u32[]', space=smem, size = 0x4, offset = 0x4, fixed_abs, tag = 'smem constant byte address 0x4 - core index']
  #allocation1 [shape = 'u32[144,128]{1,0:T(1,128)}', space=vmem, size = 0x12000, scoped, tag = 'internal scratch']
  #allocation2 [shape = 'f32[2,768]{1,0:T(2,128)}', space=vmem, size = 0x1800, scoped, tag = 'scratch operand']
  %s0 = inlined_call_operand.vmem [shape: f32[12,16,7], index: 0, kind: input, shape index: {}]
  %s1 = inlined_call_operand.vmem [shape: f32[6,128,7], index: 1, kind: input, shape index: {}]
  %s2 = inlined_call_operand.vmem [shape: f32[6,2,16], index: 2, kind: input, shape index: {}]
  %s3 = inlined_call_operand.vmem [shape: f32[1,768], index: 3, kind: input, shape index: {}]
  %s4 = inlined_call_operand.hbm [shape: f32[2,1536], index: 4, kind: output, shape index: {}]
  %s5 = sld [smem:[#allocation0]]
  $region57: #{tpu_custom_call.1} parent=0
    _
  %s7 = ssub.s32 1, %s5
  %s8 = scalar_select 0, %s7, %s5
  $region1: #{tpu_custom_call.1} parent=0
    #allocation3 [shape = 'u8[12288]{0}', space=vmem, size = 0x3000, scoped, tag = 'output window, operand 0']
    #allocation4 [shape = 's32[2]{0}', space=sflag, size = 0x8, scoped, tag = 'scoped memory for tpu_custom_call.1']
    %9 = vsyncpa [#allocation4], 0
    %s10 = scalar_lea.sflag [#allocation4], 1
    %11 = vsyncpa %s10, 0
    loop: start=0, step=1, limit=6
    $region2: #{tpu_custom_call.1} parent=1 // loop_pre_header
      _
    $region3: #{tpu_custom_call.1} parent=1 // loop_header
      %s13 = sphi 0, %s17
      %p14 = scmp.ge.s32.totalorder %s13, 6
      %s20 = sphi 0, %s39
      %s21 = sphi 0, %s35
      %s22 = sphi 0, %s31
      %s23 = sphi 0, %s20
      %s24 = sphi 0, %s21
      %s25 = sphi 0, %s22
      %s26 = sphi 0, %s23
      %s27 = sphi 0, %s24
      %s28 = sphi 0, %s25
      %s44 = sphi 0, %s46
      %s47 = sphi 0, %s44
      %s48 = sphi 0, %s47
      %s64 = sphi 0, %s48
      %s70 = sphi 0, %s72
      %s73 = sphi 0, %s70
      %s74 = sphi 0, %s73
      %s90 = sphi 0, %s74
      %s98 = sphi 0, %s100
      %s101 = sphi 0, %s98
      %s102 = sphi 0, %s101
      %s118 = sphi 0, %s102
      %s122 = sphi 0, %s122
      %s124 = sphi 0, %s122
      %s125 = sphi 0, %s124
      %s139 = sphi 0, %s125
      %s145 = sphi 0, %s147
      %s148 = sphi 0, %s145
      %s149 = sphi 0, %s148
      %s165 = sphi 0, %s149
    $region4: #{tpu_custom_call.1} parent=1 // loop_header_branch
      %16 = sbr.rel (%p14) target = $region8
    $region5: #{tpu_custom_call.1} parent=1 // loop_body
      %s18 = ssub.s32 %s13, 1
      %s19 = ssub.s32 %s13, 2
      %s29 = sadd.s32 1, %s22
      %p30 = scmp.ge.s32.totalorder %s29, 2
      %s31 = scalar_select %p30, 0, %s29
      %s32 = sadd.s32 1, %s21
      %s33 = scalar_select %p30, %s32, %s21
      %p34 = scmp.ge.s32.totalorder %s33, 1
      %s35 = scalar_select %p34, 0, %s33
      %s36 = sadd.s32 1, %s20
      %s37 = scalar_select %p34, %s36, %s20
      %p38 = scmp.ge.s32.totalorder %s37, 2
      %s39 = scalar_select %p38, 0, %s37
      %s40 = ssub.s32 %s20, %s39
      %s41 = ssub.s32 %s21, %s35
      %s42 = sor.u32 %s40, %s41
      %p43 = scmp.eq.s32.totalorder %s42, 0
      %s45 = sadd.s32 %s44, 1
      %s46 = scalar_select %p43, %s44, %s45
      %p49 = pneg %p43
      %p50 = scmp.eq.s32.totalorder %s13, 3
      %p51 = por %p49, %p50
      %p52 = scmp.ne.s32.totalorder %s44, %s47
      %p53 = scmp.eq.s32.totalorder %s13, 0
      %p54 = por %p52, %p53
      %p55 = scmp.ne.s32.totalorder %s44, %s47
      %p56 = scmp.eq.s32.totalorder %s18, 3
      %p57 = por %p55, %p56
      %p58 = scmp.ne.s32.totalorder %s47, %s48
      %p59 = scmp.eq.s32.totalorder %s18, 0
      %p60 = por %p58, %p59
      %p61 = scmp.ne.s32.totalorder %s47, %s48
      %p62 = scmp.eq.s32.totalorder %s19, 3
      %p63 = por %p61, %p62
      %p65 = scmp.ne.s32.totalorder %s48, %s64
      %p66 = scmp.eq.s32.totalorder %s19, 0
      %p67 = por %p65, %p66
      %s68 = ssub.s32 %s22, %s31
      %p69 = scmp.eq.s32.totalorder %s68, 0
      %s71 = sadd.s32 %s70, 1
      %s72 = scalar_select %p69, %s70, %s71
      %p75 = pneg %p69
      %p76 = scmp.eq.s32.totalorder %s13, 3
      %p77 = por %p75, %p76
      %p78 = scmp.ne.s32.totalorder %s70, %s73
      %p79 = scmp.eq.s32.totalorder %s13, 0
      %p80 = por %p78, %p79
      %p81 = scmp.ne.s32.totalorder %s70, %s73
      %p82 = scmp.eq.s32.totalorder %s18, 3
      %p83 = por %p81, %p82
      %p84 = scmp.ne.s32.totalorder %s73, %s74
      %p85 = scmp.eq.s32.totalorder %s18, 0
      %p86 = por %p84, %p85
      %p87 = scmp.ne.s32.totalorder %s73, %s74
      %p88 = scmp.eq.s32.totalorder %s19, 3
      %p89 = por %p87, %p88
      %p91 = scmp.ne.s32.totalorder %s74, %s90
      %p92 = scmp.eq.s32.totalorder %s19, 0
      %p93 = por %p91, %p92
      %s94 = ssub.s32 %s22, %s31
      %s95 = ssub.s32 %s21, %s35
      %s96 = sor.u32 %s94, %s95
      %p97 = scmp.eq.s32.totalorder %s96, 0
      %s99 = sadd.s32 %s98, 1
      %s100 = scalar_select %p97, %s98, %s99
      %p103 = pneg %p97
      %p104 = scmp.eq.s32.totalorder %s13, 3
      %p105 = por %p103, %p104
      %p106 = scmp.ne.s32.totalorder %s98, %s101
      %p107 = scmp.eq.s32.totalorder %s13, 0
      %p108 = por %p106, %p107
      %p109 = scmp.ne.s32.totalorder %s98, %s101
      %p110 = scmp.eq.s32.totalorder %s18, 3
      %p111 = por %p109, %p110
      %p112 = scmp.ne.s32.totalorder %s101, %s102
      %p113 = scmp.eq.s32.totalorder %s18, 0
      %p114 = por %p112, %p113
      %p115 = scmp.ne.s32.totalorder %s101, %s102
      %p116 = scmp.eq.s32.totalorder %s19, 3
      %p117 = por %p115, %p116
      %p119 = scmp.ne.s32.totalorder %s102, %s118
      %p120 = scmp.eq.s32.totalorder %s19, 0
      %p121 = por %p119, %p120
      %s123 = sadd.s32 %s122, 1
      %p126 = scmp.eq.s32.totalorder %s13, 3
      %p127 = scmp.ne.s32.totalorder %s122, %s124
      %p128 = scmp.eq.s32.totalorder %s13, 0
      %p129 = por %p127, %p128
      %p130 = scmp.ne.s32.totalorder %s122, %s124
      %p131 = scmp.eq.s32.totalorder %s18, 3
      %p132 = por %p130, %p131
      %p133 = scmp.ne.s32.totalorder %s124, %s125
      %p134 = scmp.eq.s32.totalorder %s18, 0
      %p135 = por %p133, %p134
      %p136 = scmp.ne.s32.totalorder %s124, %s125
      %p137 = scmp.eq.s32.totalorder %s19, 3
      %p138 = por %p136, %p137
      %p140 = scmp.ne.s32.totalorder %s125, %s139
      %p141 = scmp.eq.s32.totalorder %s19, 0
      %p142 = por %p140, %p141
      %s143 = ssub.s32 %s20, %s39
      %p144 = scmp.eq.s32.totalorder %s143, 0
      %s146 = sadd.s32 %s145, 1
      %s147 = scalar_select %p144, %s145, %s146
      %p150 = pneg %p144
      %p151 = scmp.eq.s32.totalorder %s13, 3
      %p152 = por %p150, %p151
      %p153 = scmp.ne.s32.totalorder %s145, %s148
      %p154 = scmp.eq.s32.totalorder %s13, 0
      %p155 = por %p153, %p154
      %p156 = scmp.ne.s32.totalorder %s145, %s148
      %p157 = scmp.eq.s32.totalorder %s18, 3
      %p158 = por %p156, %p157
      %p159 = scmp.ne.s32.totalorder %s148, %s149
      %p160 = scmp.eq.s32.totalorder %s18, 0
      %p161 = por %p159, %p160
      %p162 = scmp.ne.s32.totalorder %s148, %s149
      %p163 = scmp.eq.s32.totalorder %s19, 3
      %p164 = por %p162, %p163
      %p166 = scmp.ne.s32.totalorder %s149, %s165
      %p167 = scmp.eq.s32.totalorder %s19, 0
      %p168 = por %p166, %p167
      %p169 = scmp.le.s32.totalorder 1, %s13
      %p170 = scmp.lt.s32.totalorder %s13, 5
      %p171 = pnand %p169, %p170
      %p172 = pneg %p171
      // Predicated region
      $region9: #{tpu_custom_call.1} parent=5 // pred_check
        _
      $region10: #{tpu_custom_call.1} parent=5 // pred_check_branch
        %174 = sbr.rel (%p171) target = $region12
      $region11: #{tpu_custom_call.1} parent=5 // pred_region
        %s175 = ssub.s32 %s13, 1
        // Predicated region
        $region13: #{tpu_custom_call.1} parent=11 // pred_check
          %p176 = pneg %p135
        $region14: #{tpu_custom_call.1} parent=11 // pred_check_branch
          %178 = sbr.rel (%p176) target = $region16
        $region15: #{tpu_custom_call.1} parent=11 // pred_region
          _
        $region16: #{tpu_custom_call.1} parent=11 // pred_fallthru
          _
      $region12: #{tpu_custom_call.1} parent=5 // pred_fallthru
        _
      %p179 = scmp.lt.s32.totalorder %s13, 4
      // Predicated region
      $region17: #{tpu_custom_call.1} parent=5 // pred_check
        %p180 = pneg %p179
      $region18: #{tpu_custom_call.1} parent=5 // pred_check_branch
        %182 = sbr.rel (%p180) target = $region20
      $region19: #{tpu_custom_call.1} parent=5 // pred_region
        // Predicated region
        $region21: #{tpu_custom_call.1} parent=19 // pred_check
          %p183 = pneg %p54
        $region22: #{tpu_custom_call.1} parent=19 // pred_check_branch
          %185 = sbr.rel (%p183) target = $region24
        $region23: #{tpu_custom_call.1} parent=19 // pred_region
          %s186 = smul.u32 6, %s20
          %s187 = smul.u32 2, %s21
          %p188 = scmp.lt.s32.totalorder %s186, 11
          %s189 = scalar_select %p188, %s186, 11
          %p190 = scmp.lt.s32.totalorder %s187, 1
          %s191 = scalar_select %p190, %s187, 1
          %s192 = smul.addr %s189, 2
          %s193 = sadd.s32 %s191, %s192
          %s194 = smul.addr %s193, 8
          %s195 = scalar_lea.vmem %s0, %s194
          %s196 = smul.u32 6, %s20
          %s197 = smul.u32 2, %s21
        $region24: #{tpu_custom_call.1} parent=19 // pred_fallthru
          _
        // Predicated region
        $region25: #{tpu_custom_call.1} parent=19 // pred_check
          %p198 = pneg %p80
        $region26: #{tpu_custom_call.1} parent=19 // pred_check_branch
          %200 = sbr.rel (%p198) target = $region28
        $region27: #{tpu_custom_call.1} parent=19 // pred_region
          %s201 = smul.u32 3, %s22
          %p202 = scmp.lt.s32.totalorder %s201, 5
          %s203 = scalar_select %p202, %s201, 5
          %s204 = smul.addr %s203, 16
          %s205 = smul.addr %s204, 8
          %s206 = scalar_lea.vmem %s1, %s205
          %s207 = smul.u32 3, %s22
        $region28: #{tpu_custom_call.1} parent=19 // pred_fallthru
          _
        // Predicated region
        $region29: #{tpu_custom_call.1} parent=19 // pred_check
          %p208 = pneg %p108
        $region30: #{tpu_custom_call.1} parent=19 // pred_check_branch
          %210 = sbr.rel (%p208) target = $region32
        $region31: #{tpu_custom_call.1} parent=19 // pred_region
          %s211 = smul.u32 3, %s22
          %p212 = scmp.lt.s32.totalorder %s211, 5
          %s213 = scalar_select %p212, %s211, 5
          %p214 = scmp.lt.s32.totalorder %s21, 0
          %s215 = scalar_select %p214, %s21, 0
          %s216 = sadd.s32 %s215, %s213
          %s217 = smul.addr %s216, 2
          %s218 = scalar_lea.vmem %s2, %s217
          %s219 = smul.u32 3, %s22
        $region32: #{tpu_custom_call.1} parent=19 // pred_fallthru
          _
      $region20: #{tpu_custom_call.1} parent=5 // pred_fallthru
        _
      %p220 = scmp.le.s32.totalorder 1, %s13
      %p221 = scmp.lt.s32.totalorder %s13, 5
      %p222 = pnand %p220, %p221
      %p223 = pneg %p222
      // Predicated region
      $region33: #{tpu_custom_call.1} parent=5 // pred_check
        _
      $region34: #{tpu_custom_call.1} parent=5 // pred_check_branch
        %225 = sbr.rel (%p222) target = $region36
      $region35: #{tpu_custom_call.1} parent=5 // pred_region
        %s226 = ssub.s32 %s13, 1
        %s227 = smul.u32 6, %s23
        %s228 = smul.u32 2, %s24
        %p229 = scmp.lt.s32.totalorder %s227, 11
        %s230 = scalar_select %p229, %s227, 11
        %p231 = scmp.lt.s32.totalorder %s228, 1
        %s232 = scalar_select %p231, %s228, 1
        %s233 = smul.addr %s230, 2
        %s234 = sadd.s32 %s232, %s233
        %s235 = smul.addr %s234, 8
        %s236 = scalar_lea.vmem %s0, %s235
        %p237 = pneg %p60
        %p238 = pneg %p57
        %s239 = smul.u32 3, %s25
        %p240 = scmp.lt.s32.totalorder %s239, 5
        %s241 = scalar_select %p240, %s239, 5
        %s242 = smul.addr %s241, 16
        %s243 = smul.addr %s242, 8
        %s244 = scalar_lea.vmem %s1, %s243
        %p245 = pneg %p86
        %p246 = pneg %p83
        %s247 = smul.u32 3, %s25
        %p248 = scmp.lt.s32.totalorder %s247, 5
        %s249 = scalar_select %p248, %s247, 5
        %p250 = scmp.lt.s32.totalorder %s24, 0
        %s251 = scalar_select %p250, %s24, 0
        %s252 = sadd.s32 %s251, %s249
        %s253 = smul.addr %s252, 2
        %s254 = scalar_lea.vmem %s2, %s253
        %p255 = pneg %p114
        %p256 = pneg %p111
        %p257 = pneg %p135
        %p258 = pneg %p132
        %p259 = pneg %p161
        %p260 = pneg %p158
        %s261 = sand.u32 %s148, 1
        %s262 = scalar_lea.sflag [#allocation4], %s261
        %s263 = sand.u32 %s148, 1
        %s264 = smul.addr %s263, 12
        %s265 = scalar_lea.vmem [#allocation3], %s264
        %s266 = smul.u32 6, %s23
        %s267 = smul.u32 2, %s24
        %p268 = scmp.lt.s32.totalorder %s266, 11
        %s269 = scalar_select %p268, %s266, 11
        %p270 = scmp.lt.s32.totalorder %s267, 1
        %s271 = scalar_select %p270, %s267, 1
        %s272 = smul.addr %s269, 2
        %s273 = sadd.s32 %s271, %s272
        %s274 = smul.addr %s273, 8
        %s275 = scalar_lea.vmem %s0, %s274
        %s276 = smul.u32 6, %s23
        %s277 = smul.u32 2, %s24
        %s278 = smul.u32 3, %s25
        %p279 = scmp.lt.s32.totalorder %s278, 5
        %s280 = scalar_select %p279, %s278, 5
        %s281 = smul.addr %s280, 16
        %s282 = smul.addr %s281, 8
        %s283 = scalar_lea.vmem %s1, %s282
        %s284 = smul.u32 3, %s25
        %s285 = smul.u32 3, %s25
        %p286 = scmp.lt.s32.totalorder %s285, 5
        %s287 = scalar_select %p286, %s285, 5
        %p288 = scmp.lt.s32.totalorder %s24, 0
        %s289 = scalar_select %p288, %s24, 0
        %s290 = sadd.s32 %s289, %s287
        %s291 = smul.addr %s290, 2
        %s292 = scalar_lea.vmem %s2, %s291
        %s293 = smul.u32 3, %s25
        %s294 = smul.u32 6, %s23
        %p295 = scmp.eq.s32.totalorder %s24, 0
        %p296 = scmp.eq.s32.totalorder %s25, 0
        %p297 = pnand %p295, %p296
        %p298 = pneg %p297
        // Predicated region
        $region37: #{tpu_custom_call.1} parent=35 // pred_check
          _
        $region38: #{tpu_custom_call.1} parent=35 // pred_check_branch
          %300 = sbr.rel (%p297) target = $region40
        $region39: #{tpu_custom_call.1} parent=35 // pred_region
          %301 = vst [vmem:[#allocation2] sm:$0xff] 0.0
          %302 = vst [vmem:[#allocation2 + $0x8] sm:$0xf] 0.0
        $region40: #{tpu_custom_call.1} parent=35 // pred_fallthru
          _
        %v303 = vld [vmem:[%s275] sm:$0xff]
        %v304 = vld [vmem:[%s275 + $0x8] sm:$0xff]
        %v305 = vld [vmem:[%s275 + $0x10] sm:$0xff]
        %v306 = vld [vmem:[%s275 + $0x18] sm:$0xff]
        %v307 = vld [vmem:[%s275 + $0x20] sm:$0xff]
        %v308 = vld [vmem:[%s275 + $0x28] sm:$0xff]
        %v309 = vld [vmem:[%s275 + $0x30] sm:$0xff]
        %v310 = vld [vmem:[%s275 + $0x38] sm:$0xff]
        %v311 = vld [vmem:[%s275 + $0x40] sm:$0xff]
        %v312 = vld [vmem:[%s275 + $0x48] sm:$0xff]
        %v313 = vld [vmem:[%s275 + $0x50] sm:$0xff]
        %v314 = vld [vmem:[%s275 + $0x58] sm:$0xff]
        %v315 = vld [vmem:[%s283] sm:$0xff]
        %v316 = vld [vmem:[%s283 + $0x8] sm:$0xff]
        %v317 = vld [vmem:[%s283 + $0x10] sm:$0xff]
        %v318 = vld [vmem:[%s283 + $0x18] sm:$0xff]
        %v319 = vld [vmem:[%s283 + $0x20] sm:$0xff]
        %v320 = vld [vmem:[%s283 + $0x28] sm:$0xff]
        %v321 = vld [vmem:[%s283 + $0x30] sm:$0xff]
        %v322 = vld [vmem:[%s283 + $0x38] sm:$0xff]
        %v323 = vld [vmem:[%s283 + $0x40] sm:$0xff]
        %v324 = vld [vmem:[%s283 + $0x48] sm:$0xff]
        %v325 = vld [vmem:[%s283 + $0x50] sm:$0xff]
        %v326 = vld [vmem:[%s283 + $0x58] sm:$0xff]
        %v327 = vld [vmem:[%s283 + $0x60] sm:$0xff]
        %v328 = vld [vmem:[%s283 + $0x68] sm:$0xff]
        %v329 = vld [vmem:[%s283 + $0x70] sm:$0xff]
        %v330 = vld [vmem:[%s283 + $0x78] sm:$0xff]
        %v331 = vld [vmem:[%s292] sm:$0x3]
        %vm332 = vcmask 56320
        %v334 = vsel %vm332, %v303, 0
        %v337 = vsel %vm332, %v304, 0
        %v340 = vsel %vm332, %v305, 0
        %v343 = vsel %vm332, %v306, 0
        %v346 = vsel %vm332, %v307, 0
        %v349 = vsel %vm332, %v308, 0
        %v352 = vsel %vm332, %v309, 0
        %v355 = vsel %vm332, %v310, 0
        %v358 = vsel %vm332, %v311, 0
        %v361 = vsel %vm332, %v312, 0
        %v364 = vsel %vm332, %v313, 0
        %v367 = vsel %vm332, %v314, 0
        %v370 = vsel %vm332, %v315, 0
        %v373 = vsel %vm332, %v316, 0
        %v376 = vsel %vm332, %v317, 0
        %v379 = vsel %vm332, %v318, 0
        %v382 = vsel %vm332, %v319, 0
        %v385 = vsel %vm332, %v320, 0
        %v388 = vsel %vm332, %v321, 0
        %v391 = vsel %vm332, %v322, 0
        %v394 = vsel %vm332, %v323, 0
        %v397 = vsel %vm332, %v324, 0
        %v400 = vsel %vm332, %v325, 0
        %v403 = vsel %vm332, %v326, 0
        %v406 = vsel %vm332, %v327, 0
        %v409 = vsel %vm332, %v328, 0
        %v412 = vsel %vm332, %v329, 0
        %v415 = vsel %vm332, %v330, 0
        %417 = vmatprep.subr.mxu0 0.0
        %418 = vmatpush1.xpose.msra.mxu0 %v370
        %419 = vmatprep.subr.mxu0 0.0
        %420 = vmatpush1.xpose.msra.mxu0 %v373
        %421 = vmatprep.subr.mxu0 0.0
        %422 = vmatpush1.xpose.msra.mxu0 %v376
        %423 = vmatprep.subr.mxu0 0.0
        %424 = vmatpush1.xpose.msra.mxu0 %v379
        %425 = vmatprep.subr.mxu0 0.0
        %426 = vmatpush1.xpose.msra.mxu0 %v382
        %427 = vmatprep.subr.mxu0 0.0
        %428 = vmatpush1.xpose.msra.mxu0 %v385
        %429 = vmatprep.subr.mxu0 0.0
        %430 = vmatpush1.xpose.msra.mxu0 %v388
        %431 = vmatprep.subr.mxu0 0.0
        %432 = vmatpush1.xpose.msra.mxu0 %v391
        %433 = vmatprep.subr.mxu0 0.0
        %434 = vmatpush1.xpose.msra.mxu0 %v394
        %435 = vmatprep.subr.mxu0 0.0
        %436 = vmatpush1.xpose.msra.mxu0 %v397
        %437 = vmatprep.subr.mxu0 0.0
        %438 = vmatpush1.xpose.msra.mxu0 %v400
        %439 = vmatprep.subr.mxu0 0.0
        %440 = vmatpush1.xpose.msra.mxu0 %v403
        %441 = vmatprep.subr.mxu0 0.0
        %442 = vmatpush1.xpose.msra.mxu0 %v406
        %443 = vmatprep.subr.mxu0 0.0
        %444 = vmatpush1.xpose.msra.mxu0 %v409
        %445 = vmatprep.subr.mxu0 0.0
        %446 = vmatpush1.xpose.msra.mxu0 %v412
        %447 = vmatprep.subr.mxu0 0.0
        %448 = vmatpush1.xpose.msra.mxu0 %v415
        %449 = vmatprep.subr.mxu0 0.0
        %450 = vmatpush1.xpose.msra.mxu0 0.0
        %451 = vmatprep.subr.mxu0 0.0
        %452 = vmatpush1.xpose.msra.mxu0 0.0
        %453 = vmatprep.subr.mxu0 0.0
        %454 = vmatpush1.xpose.msra.mxu0 0.0
        %455 = vmatprep.subr.mxu0 0.0
        %456 = vmatpush1.xpose.msra.mxu0 0.0
        %457 = vmatprep.subr.mxu0 0.0
        %458 = vmatpush1.xpose.msra.mxu0 0.0
        %459 = vmatprep.subr.mxu0 0.0
        %460 = vmatpush1.xpose.msra.mxu0 0.0
        %461 = vmatprep.subr.mxu0 0.0
        %462 = vmatpush1.xpose.msra.mxu0 0.0
        %463 = vmatprep.subr.mxu0 0.0
        %464 = vmatpush1.xpose.msra.mxu0 0.0
        %465 = vmatprep.subr.mxu0 0.0
        %466 = vmatpush1.xpose.msra.mxu0 0.0
        %467 = vmatprep.subr.mxu0 0.0
        %468 = vmatpush1.xpose.msra.mxu0 0.0
        %469 = vmatprep.subr.mxu0 0.0
        %470 = vmatpush1.xpose.msra.mxu0 0.0
        %471 = vmatprep.subr.mxu0 0.0
        %472 = vmatpush1.xpose.msra.mxu0 0.0
        %473 = vmatprep.subr.mxu0 0.0
        %474 = vmatpush1.xpose.msra.mxu0 0.0
        %475 = vmatprep.subr.mxu0 0.0
        %476 = vmatpush1.xpose.msra.mxu0 0.0
        %477 = vmatprep.subr.mxu0 0.0
        %478 = vmatpush1.xpose.msra.mxu0 0.0
        %479 = vmatprep.subr.mxu0 0.0
        %480 = vmatpush1.xpose.msra.mxu0 0.0
        %481 = vmatprep.mubr.f32.mxu0 0.0
        %482 = vmatmul.mubr.f32.gmra.mrb[0].mxu0 %v334
        %v483 = vpop.f32.mrb[0].mxu0
        %v484 = vadd.f32 0.0, %v483
        %v485 = vpop.f32.mrb[0].mxu0
        %486 = vmatprep.mubr.f32.mxu0 0.0
        %487 = vmatmul.mubr.f32.gmra.mrb[0].mxu0 %v337
        %v488 = vpop.f32.mrb[0].mxu0
        %v489 = vadd.f32 0.0, %v488
        %v490 = vpop.f32.mrb[0].mxu0
        %491 = vmatprep.mubr.f32.mxu0 0.0
        %492 = vmatmul.mubr.f32.gmra.mrb[0].mxu0 %v340
        %v493 = vpop.f32.mrb[0].mxu0
        %v494 = vadd.f32 0.0, %v493
        %v495 = vpop.f32.mrb[0].mxu0
        %496 = vmatprep.mubr.f32.mxu0 0.0
        %497 = vmatmul.mubr.f32.gmra.mrb[0].mxu0 %v343
        %v498 = vpop.f32.mrb[0].mxu0
        %v499 = vadd.f32 0.0, %v498
        %v500 = vpop.f32.mrb[0].mxu0
        %501 = vmatprep.mubr.f32.mxu0 0.0
        %502 = vmatmul.mubr.f32.gmra.mrb[0].mxu0 %v346
        %v503 = vpop.f32.mrb[0].mxu0
        %v504 = vadd.f32 0.0, %v503
        %v505 = vpop.f32.mrb[0].mxu0
        %506 = vmatprep.mubr.f32.mxu0 0.0
        %507 = vmatmul.mubr.f32.gmra.mrb[0].mxu0 %v349
        %v508 = vpop.f32.mrb[0].mxu0
        %v509 = vadd.f32 0.0, %v508
        %v510 = vpop.f32.mrb[0].mxu0
        %511 = vmatprep.mubr.f32.mxu0 0.0
        %512 = vmatmul.mubr.f32.gmra.mrb[0].mxu0 %v352
        %v513 = vpop.f32.mrb[0].mxu0
        %v514 = vadd.f32 0.0, %v513
        %v515 = vpop.f32.mrb[0].mxu0
        %516 = vmatprep.mubr.f32.mxu0 0.0
        %517 = vmatmul.mubr.f32.gmra.mrb[0].mxu0 %v355
        %v518 = vpop.f32.mrb[0].mxu0
        %v519 = vadd.f32 0.0, %v518
        %v520 = vpop.f32.mrb[0].mxu0
        %521 = vmatprep.mubr.f32.mxu0 0.0
        %522 = vmatmul.mubr.f32.gmra.mrb[0].mxu0 %v358
        %v523 = vpop.f32.mrb[0].mxu0
        %v524 = vadd.f32 0.0, %v523
        %v525 = vpop.f32.mrb[0].mxu0
        %526 = vmatprep.mubr.f32.mxu0 0.0
        %527 = vmatmul.mubr.f32.gmra.mrb[0].mxu0 %v361
        %v528 = vpop.f32.mrb[0].mxu0
        %v529 = vadd.f32 0.0, %v528
        %v530 = vpop.f32.mrb[0].mxu0
        %531 = vmatprep.mubr.f32.mxu0 0.0
        %532 = vmatmul.mubr.f32.gmra.mrb[0].mxu0 %v364
        %v533 = vpop.f32.mrb[0].mxu0
        %v534 = vadd.f32 0.0, %v533
        %v535 = vpop.f32.mrb[0].mxu0
        %536 = vmatprep.mubr.f32.mxu0 0.0
        %537 = vmatmul.mubr.f32.gmra.mrb[0].mxu0 %v367
        %v538 = vpop.f32.mrb[0].mxu0
        %v539 = vadd.f32 0.0, %v538
        %v540 = vpop.f32.mrb[0].mxu0
        %541 = vdwg.mxu0
        %vm542 = vcmask 130048
        %v544 = vsel %vm542, %v331, 0
        %546 = vmatprep.subr.mxu0 0.0
        %547 = vmatpush1.msra.mxu0 %v484
        %548 = vmatprep.subr.mxu0 0.0
        %549 = vmatpush1.msra.mxu0 %v489
        %550 = vmatprep.subr.mxu0 0.0
        %551 = vmatpush1.msra.mxu0 0.0
        %552 = vmatprep.subr.mxu0 0.0
        %553 = vmatpush1.msra.mxu0 0.0
        %554 = vmatprep.subr.mxu0 0.0
        %555 = vmatpush1.msra.mxu0 0.0
        %556 = vmatprep.subr.mxu0 0.0
        %557 = vmatpush1.msra.mxu0 0.0
        %558 = vmatprep.subr.mxu0 0.0
        %559 = vmatpush1.msra.mxu0 0.0
        %560 = vmatprep.subr.mxu0 0.0
        %561 = vmatpush1.msra.mxu0 0.0
        %562 = vmatprep.subr.mxu0 0.0
        %563 = vmatpush1.msra.mxu0 0.0
        %564 = vmatprep.subr.mxu0 0.0
        %565 = vmatpush1.msra.mxu0 0.0
        %566 = vmatprep.subr.mxu0 0.0
        %567 = vmatpush1.msra.mxu0 0.0
        %568 = vmatprep.subr.mxu0 0.0
        %569 = vmatpush1.msra.mxu0 0.0
        %570 = vmatprep.subr.mxu0 0.0
        %571 = vmatpush1.msra.mxu0 0.0
        %572 = vmatprep.subr.mxu0 0.0
        %573 = vmatpush1.msra.mxu0 0.0
        %574 = vmatprep.subr.mxu0 0.0
        %575 = vmatpush1.msra.mxu0 0.0
        %576 = vmatprep.subr.mxu0 0.0
        %577 = vmatpush1.msra.mxu0 0.0
        %578 = vmatprep.subr.mxu0 0.0
        %579 = vmatpush1.msra.mxu0 0.0
        %580 = vmatprep.subr.mxu0 0.0
        %581 = vmatpush1.msra.mxu0 0.0
        %582 = vmatprep.subr.mxu0 0.0
        %583 = vmatpush1.msra.mxu0 0.0
        %584 = vmatprep.subr.mxu0 0.0
        %585 = vmatpush1.msra.mxu0 0.0
        %586 = vmatprep.subr.mxu0 0.0
        %587 = vmatpush1.msra.mxu0 0.0
        %588 = vmatprep.subr.mxu0 0.0
        %589 = vmatpush1.msra.mxu0 0.0
        %590 = vmatprep.subr.mxu0 0.0
        %591 = vmatpush1.msra.mxu0 0.0
        %592 = vmatprep.subr.mxu0 0.0
        %593 = vmatpush1.msra.mxu0 0.0
        %594 = vmatprep.subr.mxu0 0.0
        %595 = vmatpush1.msra.mxu0 0.0
        %596 = vmatprep.subr.mxu0 0.0
        %597 = vmatpush1.msra.mxu0 0.0
        %598 = vmatprep.subr.mxu0 0.0
        %599 = vmatpush1.msra.mxu0 0.0
        %600 = vmatprep.subr.mxu0 0.0
        %601 = vmatpush1.msra.mxu0 0.0
        %602 = vmatprep.subr.mxu0 0.0
        %603 = vmatpush1.msra.mxu0 0.0
        %604 = vmatprep.subr.mxu0 0.0
        %605 = vmatpush1.msra.mxu0 0.0
        %606 = vmatprep.subr.mxu0 0.0
        %607 = vmatpush1.msra.mxu0 0.0
        %608 = vmatprep.subr.mxu0 0.0
        %609 = vmatpush1.msra.mxu0 0.0
        %610 = vmatprep.mubr.f32.mxu0 0.0
        %611 = vmatmul.mubr.f32.gmra.mrb[0].mxu0 %v544
        %v612 = vpop.f32.mrb[0].mxu0
        %v613 = vadd.f32 0.0, %v612
        %v614 = vpop.f32.mrb[0].mxu0
        %615 = vdwg.mxu0
        %v616 = vld [vmem:[#allocation2] sm:$0x3]
        %v617 = vadd.f32 %v616, %v613
        %618 = vst [vmem:[#allocation2] sm:$0x3] %v617
        %619 = vmatprep.subr.mxu0 0.0
        %620 = vmatpush1.msra.mxu0 %v494
        %621 = vmatprep.subr.mxu0 0.0
        %622 = vmatpush1.msra.mxu0 %v499
        %623 = vmatprep.subr.mxu0 0.0
        %624 = vmatpush1.msra.mxu0 0.0
        %625 = vmatprep.subr.mxu0 0.0
        %626 = vmatpush1.msra.mxu0 0.0
        %627 = vmatprep.subr.mxu0 0.0
        %628 = vmatpush1.msra.mxu0 0.0
        %629 = vmatprep.subr.mxu0 0.0
        %630 = vmatpush1.msra.mxu0 0.0
        %631 = vmatprep.subr.mxu0 0.0
        %632 = vmatpush1.msra.mxu0 0.0
        %633 = vmatprep.subr.mxu0 0.0
        %634 = vmatpush1.msra.mxu0 0.0
        %635 = vmatprep.subr.mxu0 0.0
        %636 = vmatpush1.msra.mxu0 0.0
        %637 = vmatprep.subr.mxu0 0.0
        %638 = vmatpush1.msra.mxu0 0.0
        %639 = vmatprep.subr.mxu0 0.0
        %640 = vmatpush1.msra.mxu0 0.0
        %641 = vmatprep.subr.mxu0 0.0
        %642 = vmatpush1.msra.mxu0 0.0
        %643 = vmatprep.subr.mxu0 0.0
        %644 = vmatpush1.msra.mxu0 0.0
        %645 = vmatprep.subr.mxu0 0.0
        %646 = vmatpush1.msra.mxu0 0.0
        %647 = vmatprep.subr.mxu0 0.0
        %648 = vmatpush1.msra.mxu0 0.0
        %649 = vmatprep.subr.mxu0 0.0
        %650 = vmatpush1.msra.mxu0 0.0
        %651 = vmatprep.subr.mxu0 0.0
        %652 = vmatpush1.msra.mxu0 0.0
        %653 = vmatprep.subr.mxu0 0.0
        %654 = vmatpush1.msra.mxu0 0.0
        %655 = vmatprep.subr.mxu0 0.0
        %656 = vmatpush1.msra.mxu0 0.0
        %657 = vmatprep.subr.mxu0 0.0
        %658 = vmatpush1.msra.mxu0 0.0
        %659 = vmatprep.subr.mxu0 0.0
        %660 = vmatpush1.msra.mxu0 0.0
        %661 = vmatprep.subr.mxu0 0.0
        %662 = vmatpush1.msra.mxu0 0.0
        %663 = vmatprep.subr.mxu0 0.0
        %664 = vmatpush1.msra.mxu0 0.0
        %665 = vmatprep.subr.mxu0 0.0
        %666 = vmatpush1.msra.mxu0 0.0
        %667 = vmatprep.subr.mxu0 0.0
        %668 = vmatpush1.msra.mxu0 0.0
        %669 = vmatprep.subr.mxu0 0.0
        %670 = vmatpush1.msra.mxu0 0.0
        %671 = vmatprep.subr.mxu0 0.0
        %672 = vmatpush1.msra.mxu0 0.0
        %673 = vmatprep.subr.mxu0 0.0
        %674 = vmatpush1.msra.mxu0 0.0
        %675 = vmatprep.subr.mxu0 0.0
        %676 = vmatpush1.msra.mxu0 0.0
        %677 = vmatprep.subr.mxu0 0.0
        %678 = vmatpush1.msra.mxu0 0.0
        %679 = vmatprep.subr.mxu0 0.0
        %680 = vmatpush1.msra.mxu0 0.0
        %681 = vmatprep.subr.mxu0 0.0
        %682 = vmatpush1.msra.mxu0 0.0
        %683 = vmatprep.mubr.f32.mxu0 0.0
        %684 = vmatmul.mubr.f32.gmra.mrb[0].mxu0 %v544
        %v685 = vpop.f32.mrb[0].mxu0
        %v686 = vadd.f32 0.0, %v685
        %v687 = vpop.f32.mrb[0].mxu0
        %688 = vdwg.mxu0
        %v689 = vld [vmem:[#allocation2 + $0x2] sm:$0x3]
        %v690 = vadd.f32 %v689, %v686
        %691 = vst [vmem:[#allocation2 + $0x2] sm:$0x3] %v690
        %692 = vmatprep.subr.mxu0 0.0
        %693 = vmatpush1.msra.mxu0 %v504
        %694 = vmatprep.subr.mxu0 0.0
        %695 = vmatpush1.msra.mxu0 %v509
        %696 = vmatprep.subr.mxu0 0.0
        %697 = vmatpush1.msra.mxu0 0.0
        %698 = vmatprep.subr.mxu0 0.0
        %699 = vmatpush1.msra.mxu0 0.0
        %700 = vmatprep.subr.mxu0 0.0
        %701 = vmatpush1.msra.mxu0 0.0
        %702 = vmatprep.subr.mxu0 0.0
        %703 = vmatpush1.msra.mxu0 0.0
        %704 = vmatprep.subr.mxu0 0.0
        %705 = vmatpush1.msra.mxu0 0.0
        %706 = vmatprep.subr.mxu0 0.0
        %707 = vmatpush1.msra.mxu0 0.0
        %708 = vmatprep.subr.mxu0 0.0
        %709 = vmatpush1.msra.mxu0 0.0
        %710 = vmatprep.subr.mxu0 0.0
        %711 = vmatpush1.msra.mxu0 0.0
        %712 = vmatprep.subr.mxu0 0.0
        %713 = vmatpush1.msra.mxu0 0.0
        %714 = vmatprep.subr.mxu0 0.0
        %715 = vmatpush1.msra.mxu0 0.0
        %716 = vmatprep.subr.mxu0 0.0
        %717 = vmatpush1.msra.mxu0 0.0
        %718 = vmatprep.subr.mxu0 0.0
        %719 = vmatpush1.msra.mxu0 0.0
        %720 = vmatprep.subr.mxu0 0.0
        %721 = vmatpush1.msra.mxu0 0.0
        %722 = vmatprep.subr.mxu0 0.0
        %723 = vmatpush1.msra.mxu0 0.0
        %724 = vmatprep.subr.mxu0 0.0
        %725 = vmatpush1.msra.mxu0 0.0
        %726 = vmatprep.subr.mxu0 0.0
        %727 = vmatpush1.msra.mxu0 0.0
        %728 = vmatprep.subr.mxu0 0.0
        %729 = vmatpush1.msra.mxu0 0.0
        %730 = vmatprep.subr.mxu0 0.0
        %731 = vmatpush1.msra.mxu0 0.0
        %732 = vmatprep.subr.mxu0 0.0
        %733 = vmatpush1.msra.mxu0 0.0
        %734 = vmatprep.subr.mxu0 0.0
        %735 = vmatpush1.msra.mxu0 0.0
        %736 = vmatprep.subr.mxu0 0.0
        %737 = vmatpush1.msra.mxu0 0.0
        %738 = vmatprep.subr.mxu0 0.0
        %739 = vmatpush1.msra.mxu0 0.0
        %740 = vmatprep.subr.mxu0 0.0
        %741 = vmatpush1.msra.mxu0 0.0
        %742 = vmatprep.subr.mxu0 0.0
        %743 = vmatpush1.msra.mxu0 0.0
        %744 = vmatprep.subr.mxu0 0.0
        %745 = vmatpush1.msra.mxu0 0.0
        %746 = vmatprep.subr.mxu0 0.0
        %747 = vmatpush1.msra.mxu0 0.0
        %748 = vmatprep.subr.mxu0 0.0
        %749 = vmatpush1.msra.mxu0 0.0
        %750 = vmatprep.subr.mxu0 0.0
        %751 = vmatpush1.msra.mxu0 0.0
        %752 = vmatprep.subr.mxu0 0.0
        %753 = vmatpush1.msra.mxu0 0.0
        %754 = vmatprep.subr.mxu0 0.0
        %755 = vmatpush1.msra.mxu0 0.0
        %756 = vmatprep.mubr.f32.mxu0 0.0
        %757 = vmatmul.mubr.f32.gmra.mrb[0].mxu0 %v544
        %v758 = vpop.f32.mrb[0].mxu0
        %v759 = vadd.f32 0.0, %v758
        %v760 = vpop.f32.mrb[0].mxu0
        %761 = vdwg.mxu0
        %v762 = vld [vmem:[#allocation2 + $0x4] sm:$0x3]
        %v763 = vadd.f32 %v762, %v759
        %764 = vst [vmem:[#allocation2 + $0x4] sm:$0x3] %v763
        %765 = vmatprep.subr.mxu0 0.0
        %766 = vmatpush1.msra.mxu0 %v514
        %767 = vmatprep.subr.mxu0 0.0
        %768 = vmatpush1.msra.mxu0 %v519
        %769 = vmatprep.subr.mxu0 0.0
        %770 = vmatpush1.msra.mxu0 0.0
        %771 = vmatprep.subr.mxu0 0.0
        %772 = vmatpush1.msra.mxu0 0.0
        %773 = vmatprep.subr.mxu0 0.0
        %774 = vmatpush1.msra.mxu0 0.0
        %775 = vmatprep.subr.mxu0 0.0
        %776 = vmatpush1.msra.mxu0 0.0
        %777 = vmatprep.subr.mxu0 0.0
        %778 = vmatpush1.msra.mxu0 0.0
        %779 = vmatprep.subr.mxu0 0.0
        %780 = vmatpush1.msra.mxu0 0.0
        %781 = vmatprep.subr.mxu0 0.0
        %782 = vmatpush1.msra.mxu0 0.0
        %783 = vmatprep.subr.mxu0 0.0
        %784 = vmatpush1.msra.mxu0 0.0
        %785 = vmatprep.subr.mxu0 0.0
        %786 = vmatpush1.msra.mxu0 0.0
        %787 = vmatprep.subr.mxu0 0.0
        %788 = vmatpush1.msra.mxu0 0.0
        %789 = vmatprep.subr.mxu0 0.0
        %790 = vmatpush1.msra.mxu0 0.0
        %791 = vmatprep.subr.mxu0 0.0
        %792 = vmatpush1.msra.mxu0 0.0
        %793 = vmatprep.subr.mxu0 0.0
        %794 = vmatpush1.msra.mxu0 0.0
        %795 = vmatprep.subr.mxu0 0.0
        %796 = vmatpush1.msra.mxu0 0.0
        %797 = vmatprep.subr.mxu0 0.0
        %798 = vmatpush1.msra.mxu0 0.0
        %799 = vmatprep.subr.mxu0 0.0
        %800 = vmatpush1.msra.mxu0 0.0
        %801 = vmatprep.subr.mxu0 0.0
        %802 = vmatpush1.msra.mxu0 0.0
        %803 = vmatprep.subr.mxu0 0.0
        %804 = vmatpush1.msra.mxu0 0.0
        %805 = vmatprep.subr.mxu0 0.0
        %806 = vmatpush1.msra.mxu0 0.0
        %807 = vmatprep.subr.mxu0 0.0
        %808 = vmatpush1.msra.mxu0 0.0
        %809 = vmatprep.subr.mxu0 0.0
        %810 = vmatpush1.msra.mxu0 0.0
        %811 = vmatprep.subr.mxu0 0.0
        %812 = vmatpush1.msra.mxu0 0.0
        %813 = vmatprep.subr.mxu0 0.0
        %814 = vmatpush1.msra.mxu0 0.0
        %815 = vmatprep.subr.mxu0 0.0
        %816 = vmatpush1.msra.mxu0 0.0
        %817 = vmatprep.subr.mxu0 0.0
        %818 = vmatpush1.msra.mxu0 0.0
        %819 = vmatprep.subr.mxu0 0.0
        %820 = vmatpush1.msra.mxu0 0.0
        %821 = vmatprep.subr.mxu0 0.0
        %822 = vmatpush1.msra.mxu0 0.0
        %823 = vmatprep.subr.mxu0 0.0
        %824 = vmatpush1.msra.mxu0 0.0
        %825 = vmatprep.subr.mxu0 0.0
        %826 = vmatpush1.msra.mxu0 0.0
        %827 = vmatprep.subr.mxu0 0.0
        %828 = vmatpush1.msra.mxu0 0.0
        %829 = vmatprep.mubr.f32.mxu0 0.0
        %830 = vmatmul.mubr.f32.gmra.mrb[0].mxu0 %v544
        %v831 = vpop.f32.mrb[0].mxu0
        %v832 = vadd.f32 0.0, %v831
        %v833 = vpop.f32.mrb[0].mxu0
        %834 = vdwg.mxu0
        %v835 = vld [vmem:[#allocation2 + $0x6] sm:$0x3]
        %v836 = vadd.f32 %v835, %v832
        %837 = vst [vmem:[#allocation2 + $0x6] sm:$0x3] %v836
        %838 = vmatprep.subr.mxu0 0.0
        %839 = vmatpush1.msra.mxu0 %v524
        %840 = vmatprep.subr.mxu0 0.0
        %841 = vmatpush1.msra.mxu0 %v529
        %842 = vmatprep.subr.mxu0 0.0
        %843 = vmatpush1.msra.mxu0 0.0
        %844 = vmatprep.subr.mxu0 0.0
        %845 = vmatpush1.msra.mxu0 0.0
        %846 = vmatprep.subr.mxu0 0.0
        %847 = vmatpush1.msra.mxu0 0.0
        %848 = vmatprep.subr.mxu0 0.0
        %849 = vmatpush1.msra.mxu0 0.0
        %850 = vmatprep.subr.mxu0 0.0
        %851 = vmatpush1.msra.mxu0 0.0
        %852 = vmatprep.subr.mxu0 0.0
        %853 = vmatpush1.msra.mxu0 0.0
        %854 = vmatprep.subr.mxu0 0.0
        %855 = vmatpush1.msra.mxu0 0.0
        %856 = vmatprep.subr.mxu0 0.0
        %857 = vmatpush1.msra.mxu0 0.0
        %858 = vmatprep.subr.mxu0 0.0
        %859 = vmatpush1.msra.mxu0 0.0
        %860 = vmatprep.subr.mxu0 0.0
        %861 = vmatpush1.msra.mxu0 0.0
        %862 = vmatprep.subr.mxu0 0.0
        %863 = vmatpush1.msra.mxu0 0.0
        %864 = vmatprep.subr.mxu0 0.0
        %865 = vmatpush1.msra.mxu0 0.0
        %866 = vmatprep.subr.mxu0 0.0
        %867 = vmatpush1.msra.mxu0 0.0
        %868 = vmatprep.subr.mxu0 0.0
        %869 = vmatpush1.msra.mxu0 0.0
        %870 = vmatprep.subr.mxu0 0.0
        %871 = vmatpush1.msra.mxu0 0.0
        %872 = vmatprep.subr.mxu0 0.0
        %873 = vmatpush1.msra.mxu0 0.0
        %874 = vmatprep.subr.mxu0 0.0
        %875 = vmatpush1.msra.mxu0 0.0
        %876 = vmatprep.subr.mxu0 0.0
        %877 = vmatpush1.msra.mxu0 0.0
        %878 = vmatprep.subr.mxu0 0.0
        %879 = vmatpush1.msra.mxu0 0.0
        %880 = vmatprep.subr.mxu0 0.0
        %881 = vmatpush1.msra.mxu0 0.0
        %882 = vmatprep.subr.mxu0 0.0
        %883 = vmatpush1.msra.mxu0 0.0
        %884 = vmatprep.subr.mxu0 0.0
        %885 = vmatpush1.msra.mxu0 0.0
        %886 = vmatprep.subr.mxu0 0.0
        %887 = vmatpush1.msra.mxu0 0.0
        %888 = vmatprep.subr.mxu0 0.0
        %889 = vmatpush1.msra.mxu0 0.0
        %890 = vmatprep.subr.mxu0 0.0
        %891 = vmatpush1.msra.mxu0 0.0
        %892 = vmatprep.subr.mxu0 0.0
        %893 = vmatpush1.msra.mxu0 0.0
        %894 = vmatprep.subr.mxu0 0.0
        %895 = vmatpush1.msra.mxu0 0.0
        %896 = vmatprep.subr.mxu0 0.0
        %897 = vmatpush1.msra.mxu0 0.0
        %898 = vmatprep.subr.mxu0 0.0
        %899 = vmatpush1.msra.mxu0 0.0
        %900 = vmatprep.subr.mxu0 0.0
        %901 = vmatpush1.msra.mxu0 0.0
        %902 = vmatprep.mubr.f32.mxu0 0.0
        %903 = vmatmul.mubr.f32.gmra.mrb[0].mxu0 %v544
        %v904 = vpop.f32.mrb[0].mxu0
        %v905 = vadd.f32 0.0, %v904
        %v906 = vpop.f32.mrb[0].mxu0
        %907 = vdwg.mxu0
        %v908 = vld [vmem:[#allocation2 + $0x8] sm:$0x3]
        %v909 = vadd.f32 %v908, %v905
        %910 = vst [vmem:[#allocation2 + $0x8] sm:$0x3] %v909
        %911 = vmatprep.subr.mxu0 0.0
        %912 = vmatpush1.msra.mxu0 %v534
        %913 = vmatprep.subr.mxu0 0.0
        %914 = vmatpush1.msra.mxu0 %v539
        %915 = vmatprep.subr.mxu0 0.0
        %916 = vmatpush1.msra.mxu0 0.0
        %917 = vmatprep.subr.mxu0 0.0
        %918 = vmatpush1.msra.mxu0 0.0
        %919 = vmatprep.subr.mxu0 0.0
        %920 = vmatpush1.msra.mxu0 0.0
        %921 = vmatprep.subr.mxu0 0.0
        %922 = vmatpush1.msra.mxu0 0.0
        %923 = vmatprep.subr.mxu0 0.0
        %924 = vmatpush1.msra.mxu0 0.0
        %925 = vmatprep.subr.mxu0 0.0
        %926 = vmatpush1.msra.mxu0 0.0
        %927 = vmatprep.subr.mxu0 0.0
        %928 = vmatpush1.msra.mxu0 0.0
        %929 = vmatprep.subr.mxu0 0.0
        %930 = vmatpush1.msra.mxu0 0.0
        %931 = vmatprep.subr.mxu0 0.0
        %932 = vmatpush1.msra.mxu0 0.0
        %933 = vmatprep.subr.mxu0 0.0
        %934 = vmatpush1.msra.mxu0 0.0
        %935 = vmatprep.subr.mxu0 0.0
        %936 = vmatpush1.msra.mxu0 0.0
        %937 = vmatprep.subr.mxu0 0.0
        %938 = vmatpush1.msra.mxu0 0.0
        %939 = vmatprep.subr.mxu0 0.0
        %940 = vmatpush1.msra.mxu0 0.0
        %941 = vmatprep.subr.mxu0 0.0
        %942 = vmatpush1.msra.mxu0 0.0
        %943 = vmatprep.subr.mxu0 0.0
        %944 = vmatpush1.msra.mxu0 0.0
        %945 = vmatprep.subr.mxu0 0.0
        %946 = vmatpush1.msra.mxu0 0.0
        %947 = vmatprep.subr.mxu0 0.0
        %948 = vmatpush1.msra.mxu0 0.0
        %949 = vmatprep.subr.mxu0 0.0
        %950 = vmatpush1.msra.mxu0 0.0
        %951 = vmatprep.subr.mxu0 0.0
        %952 = vmatpush1.msra.mxu0 0.0
        %953 = vmatprep.subr.mxu0 0.0
        %954 = vmatpush1.msra.mxu0 0.0
        %955 = vmatprep.subr.mxu0 0.0
        %956 = vmatpush1.msra.mxu0 0.0
        %957 = vmatprep.subr.mxu0 0.0
        %958 = vmatpush1.msra.mxu0 0.0
        %959 = vmatprep.subr.mxu0 0.0
        %960 = vmatpush1.msra.mxu0 0.0
        %961 = vmatprep.subr.mxu0 0.0
        %962 = vmatpush1.msra.mxu0 0.0
        %963 = vmatprep.subr.mxu0 0.0
        %964 = vmatpush1.msra.mxu0 0.0
        %965 = vmatprep.subr.mxu0 0.0
        %966 = vmatpush1.msra.mxu0 0.0
        %967 = vmatprep.subr.mxu0 0.0
        %968 = vmatpush1.msra.mxu0 0.0
        %969 = vmatprep.subr.mxu0 0.0
        %970 = vmatpush1.msra.mxu0 0.0
        %971 = vmatprep.subr.mxu0 0.0
        %972 = vmatpush1.msra.mxu0 0.0
        %973 = vmatprep.subr.mxu0 0.0
        %974 = vmatpush1.msra.mxu0 0.0
        %975 = vmatprep.mubr.f32.mxu0 0.0
        %976 = vmatmul.mubr.f32.gmra.mrb[0].mxu0 %v544
        %v977 = vpop.f32.mrb[0].mxu0
        %v978 = vadd.f32 0.0, %v977
        %v979 = vpop.f32.mrb[0].mxu0
        %980 = vdwg.mxu0
        %v981 = vld [vmem:[#allocation2 + $0xa] sm:$0x3]
        %v982 = vadd.f32 %v981, %v978
        %983 = vst [vmem:[#allocation2 + $0xa] sm:$0x3] %v982
        %s984 = scalar_lea.vmem %s283, 128
        %v985 = vld [vmem:[%s984] sm:$0xff]
        %v986 = vld [vmem:[%s984 + $0x8] sm:$0xff]
        %v987 = vld [vmem:[%s984 + $0x10] sm:$0xff]
        %v988 = vld [vmem:[%s984 + $0x18] sm:$0xff]
        %v989 = vld [vmem:[%s984 + $0x20] sm:$0xff]
        %v990 = vld [vmem:[%s984 + $0x28] sm:$0xff]
        %v991 = vld [vmem:[%s984 + $0x30] sm:$0xff]
        %v992 = vld [vmem:[%s984 + $0x38] sm:$0xff]
        %v993 = vld [vmem:[%s984 + $0x40] sm:$0xff]
        %v994 = vld [vmem:[%s984 + $0x48] sm:$0xff]
        %v995 = vld [vmem:[%s984 + $0x50] sm:$0xff]
        %v996 = vld [vmem:[%s984 + $0x58] sm:$0xff]
        %v997 = vld [vmem:[%s984 + $0x60] sm:$0xff]
        %v998 = vld [vmem:[%s984 + $0x68] sm:$0xff]
        %v999 = vld [vmem:[%s984 + $0x70] sm:$0xff]
        %v1000 = vld [vmem:[%s984 + $0x78] sm:$0xff]
        %s1001 = scalar_lea.vmem %s292, 2
        %v1002 = vld [vmem:[%s1001] sm:$0x3]
        %v1004 = vsel %vm332, %v985, 0
        %v1007 = vsel %vm332, %v986, 0
        %v1010 = vsel %vm332, %v987, 0
        %v1013 = vsel %vm332, %v988, 0
        %v1016 = vsel %vm332, %v989, 0
        %v1019 = vsel %vm332, %v990, 0
        %v1022 = vsel %vm332, %v991, 0
        %v1025 = vsel %vm332, %v992, 0
        %v1028 = vsel %vm332, %v993, 0
        %v1031 = vsel %vm332, %v994, 0
        %v1034 = vsel %vm332, %v995, 0
        %v1037 = vsel %vm332, %v996, 0
        %v1040 = vsel %vm332, %v997, 0
        %v1043 = vsel %vm332, %v998, 0
        %v1046 = vsel %vm332, %v999, 0
        %v1049 = vsel %vm332, %v1000, 0
        %1051 = vmatprep.subr.mxu0 0.0
        %1052 = vmatpush1.xpose.msra.mxu0 %v1004
        %1053 = vmatprep.subr.mxu0 0.0
        %1054 = vmatpush1.xpose.msra.mxu0 %v1007
        %1055 = vmatprep.subr.mxu0 0.0
        %1056 = vmatpush1.xpose.msra.mxu0 %v1010
        %1057 = vmatprep.subr.mxu0 0.0
        %1058 = vmatpush1.xpose.msra.mxu0 %v1013
        %1059 = vmatprep.subr.mxu0 0.0
        %1060 = vmatpush1.xpose.msra.mxu0 %v1016
        %1061 = vmatprep.subr.mxu0 0.0
        %1062 = vmatpush1.xpose.msra.mxu0 %v1019
        %1063 = vmatprep.subr.mxu0 0.0
        %1064 = vmatpush1.xpose.msra.mxu0 %v1022
        %1065 = vmatprep.subr.mxu0 0.0
        %1066 = vmatpush1.xpose.msra.mxu0 %v1025
        %1067 = vmatprep.subr.mxu0 0.0
        %1068 = vmatpush1.xpose.msra.mxu0 %v1028
        %1069 = vmatprep.subr.mxu0 0.0
        %1070 = vmatpush1.xpose.msra.mxu0 %v1031
        %1071 = vmatprep.subr.mxu0 0.0
        %1072 = vmatpush1.xpose.msra.mxu0 %v1034
        %1073 = vmatprep.subr.mxu0 0.0
        %1074 = vmatpush1.xpose.msra.mxu0 %v1037
        %1075 = vmatprep.subr.mxu0 0.0
        %1076 = vmatpush1.xpose.msra.mxu0 %v1040
        %1077 = vmatprep.subr.mxu0 0.0
        %1078 = vmatpush1.xpose.msra.mxu0 %v1043
        %1079 = vmatprep.subr.mxu0 0.0
        %1080 = vmatpush1.xpose.msra.mxu0 %v1046
        %1081 = vmatprep.subr.mxu0 0.0
        %1082 = vmatpush1.xpose.msra.mxu0 %v1049
        %1083 = vmatprep.subr.mxu0 0.0
        %1084 = vmatpush1.xpose.msra.mxu0 0.0
        %1085 = vmatprep.subr.mxu0 0.0
        %1086 = vmatpush1.xpose.msra.mxu0 0.0
        %1087 = vmatprep.subr.mxu0 0.0
        %1088 = vmatpush1.xpose.msra.mxu0 0.0
        %1089 = vmatprep.subr.mxu0 0.0
        %1090 = vmatpush1.xpose.msra.mxu0 0.0
        %1091 = vmatprep.subr.mxu0 0.0
        %1092 = vmatpush1.xpose.msra.mxu0 0.0
        %1093 = vmatprep.subr.mxu0 0.0
        %1094 = vmatpush1.xpose.msra.mxu0 0.0
        %1095 = vmatprep.subr.mxu0 0.0
        %1096 = vmatpush1.xpose.msra.mxu0 0.0
        %1097 = vmatprep.subr.mxu0 0.0
        %1098 = vmatpush1.xpose.msra.mxu0 0.0
        %1099 = vmatprep.subr.mxu0 0.0
        %1100 = vmatpush1.xpose.msra.mxu0 0.0
        %1101 = vmatprep.subr.mxu0 0.0
        %1102 = vmatpush1.xpose.msra.mxu0 0.0
        %1103 = vmatprep.subr.mxu0 0.0
        %1104 = vmatpush1.xpose.msra.mxu0 0.0
        %1105 = vmatprep.subr.mxu0 0.0
        %1106 = vmatpush1.xpose.msra.mxu0 0.0
        %1107 = vmatprep.subr.mxu0 0.0
        %1108 = vmatpush1.xpose.msra.mxu0 0.0
        %1109 = vmatprep.subr.mxu0 0.0
        %1110 = vmatpush1.xpose.msra.mxu0 0.0
        %1111 = vmatprep.subr.mxu0 0.0
        %1112 = vmatpush1.xpose.msra.mxu0 0.0
        %1113 = vmatprep.subr.mxu0 0.0
        %1114 = vmatpush1.xpose.msra.mxu0 0.0
        %1115 = vmatprep.mubr.f32.mxu0 0.0
        %1116 = vmatmul.mubr.f32.gmra.mrb[0].mxu0 %v334
        %v1117 = vpop.f32.mrb[0].mxu0
        %v1118 = vadd.f32 0.0, %v1117
        %v1119 = vpop.f32.mrb[0].mxu0
        %1120 = vmatprep.mubr.f32.mxu0 0.0
        %1121 = vmatmul.mubr.f32.gmra.mrb[0].mxu0 %v337
        %v1122 = vpop.f32.mrb[0].mxu0
        %v1123 = vadd.f32 0.0, %v1122
        %v1124 = vpop.f32.mrb[0].mxu0
        %1125 = vmatprep.mubr.f32.mxu0 0.0
        %1126 = vmatmul.mubr.f32.gmra.mrb[0].mxu0 %v340
        %v1127 = vpop.f32.mrb[0].mxu0
        %v1128 = vadd.f32 0.0, %v1127
        %v1129 = vpop.f32.mrb[0].mxu0
        %1130 = vmatprep.mubr.f32.mxu0 0.0
        %1131 = vmatmul.mubr.f32.gmra.mrb[0].mxu0 %v343
        %v1132 = vpop.f32.mrb[0].mxu0
        %v1133 = vadd.f32 0.0, %v1132
        %v1134 = vpop.f32.mrb[0].mxu0
        %1135 = vmatprep.mubr.f32.mxu0 0.0
        %1136 = vmatmul.mubr.f32.gmra.mrb[0].mxu0 %v346
        %v1137 = vpop.f32.mrb[0].mxu0
        %v1138 = vadd.f32 0.0, %v1137
        %v1139 = vpop.f32.mrb[0].mxu0
        %1140 = vmatprep.mubr.f32.mxu0 0.0
        %1141 = vmatmul.mubr.f32.gmra.mrb[0].mxu0 %v349
        %v1142 = vpop.f32.mrb[0].mxu0
        %v1143 = vadd.f32 0.0, %v1142
        %v1144 = vpop.f32.mrb[0].mxu0
        %1145 = vmatprep.mubr.f32.mxu0 0.0
        %1146 = vmatmul.mubr.f32.gmra.mrb[0].mxu0 %v352
        %v1147 = vpop.f32.mrb[0].mxu0
        %v1148 = vadd.f32 0.0, %v1147
        %v1149 = vpop.f32.mrb[0].mxu0
        %1150 = vmatprep.mubr.f32.mxu0 0.0
        %1151 = vmatmul.mubr.f32.gmra.mrb[0].mxu0 %v355
        %v1152 = vpop.f32.mrb[0].mxu0
        %v1153 = vadd.f32 0.0, %v1152
        %v1154 = vpop.f32.mrb[0].mxu0
        %1155 = vmatprep.mubr.f32.mxu0 0.0
        %1156 = vmatmul.mubr.f32.gmra.mrb[0].mxu0 %v358
        %v1157 = vpop.f32.mrb[0].mxu0
        %v1158 = vadd.f32 0.0, %v1157
        %v1159 = vpop.f32.mrb[0].mxu0
        %1160 = vmatprep.mubr.f32.mxu0 0.0
        %1161 = vmatmul.mubr.f32.gmra.mrb[0].mxu0 %v361
        %v1162 = vpop.f32.mrb[0].mxu0
        %v1163 = vadd.f32 0.0, %v1162
        %v1164 = vpop.f32.mrb[0].mxu0
        %1165 = vmatprep.mubr.f32.mxu0 0.0
        %1166 = vmatmul.mubr.f32.gmra.mrb[0].mxu0 %v364
        %v1167 = vpop.f32.mrb[0].mxu0
        %v1168 = vadd.f32 0.0, %v1167
        %v1169 = vpop.f32.mrb[0].mxu0
        %1170 = vmatprep.mubr.f32.mxu0 0.0
        %1171 = vmatmul.mubr.f32.gmra.mrb[0].mxu0 %v367
        %v1172 = vpop.f32.mrb[0].mxu0
        %v1173 = vadd.f32 0.0, %v1172
        %v1174 = vpop.f32.mrb[0].mxu0
        %1175 = vdwg.mxu0
        %v1177 = vsel %vm542, %v1002, 0
        %1179 = vmatprep.subr.mxu0 0.0
        %1180 = vmatpush1.msra.mxu0 %v1118
        %1181 = vmatprep.subr.mxu0 0.0
        %1182 = vmatpush1.msra.mxu0 %v1123
        %1183 = vmatprep.subr.mxu0 0.0
        %1184 = vmatpush1.msra.mxu0 0.0
        %1185 = vmatprep.subr.mxu0 0.0
        %1186 = vmatpush1.msra.mxu0 0.0
        %1187 = vmatprep.subr.mxu0 0.0
        %1188 = vmatpush1.msra.mxu0 0.0
        %1189 = vmatprep.subr.mxu0 0.0
        %1190 = vmatpush1.msra.mxu0 0.0
        %1191 = vmatprep.subr.mxu0 0.0
        %1192 = vmatpush1.msra.mxu0 0.0
        %1193 = vmatprep.subr.mxu0 0.0
        %1194 = vmatpush1.msra.mxu0 0.0
        %1195 = vmatprep.subr.mxu0 0.0
        %1196 = vmatpush1.msra.mxu0 0.0
        %1197 = vmatprep.subr.mxu0 0.0
        %1198 = vmatpush1.msra.mxu0 0.0
        %1199 = vmatprep.subr.mxu0 0.0
        %1200 = vmatpush1.msra.mxu0 0.0
        %1201 = vmatprep.subr.mxu0 0.0
        %1202 = vmatpush1.msra.mxu0 0.0
        %1203 = vmatprep.subr.mxu0 0.0
        %1204 = vmatpush1.msra.mxu0 0.0
        %1205 = vmatprep.subr.mxu0 0.0
        %1206 = vmatpush1.msra.mxu0 0.0
        %1207 = vmatprep.subr.mxu0 0.0
        %1208 = vmatpush1.msra.mxu0 0.0
        %1209 = vmatprep.subr.mxu0 0.0
        %1210 = vmatpush1.msra.mxu0 0.0
        %1211 = vmatprep.subr.mxu0 0.0
        %1212 = vmatpush1.msra.mxu0 0.0
        %1213 = vmatprep.subr.mxu0 0.0
        %1214 = vmatpush1.msra.mxu0 0.0
        %1215 = vmatprep.subr.mxu0 0.0
        %1216 = vmatpush1.msra.mxu0 0.0
        %1217 = vmatprep.subr.mxu0 0.0
        %1218 = vmatpush1.msra.mxu0 0.0
        %1219 = vmatprep.subr.mxu0 0.0
        %1220 = vmatpush1.msra.mxu0 0.0
        %1221 = vmatprep.subr.mxu0 0.0
        %1222 = vmatpush1.msra.mxu0 0.0
        %1223 = vmatprep.subr.mxu0 0.0
        %1224 = vmatpush1.msra.mxu0 0.0
        %1225 = vmatprep.subr.mxu0 0.0
        %1226 = vmatpush1.msra.mxu0 0.0
        %1227 = vmatprep.subr.mxu0 0.0
        %1228 = vmatpush1.msra.mxu0 0.0
        %1229 = vmatprep.subr.mxu0 0.0
        %1230 = vmatpush1.msra.mxu0 0.0
        %1231 = vmatprep.subr.mxu0 0.0
        %1232 = vmatpush1.msra.mxu0 0.0
        %1233 = vmatprep.subr.mxu0 0.0
        %1234 = vmatpush1.msra.mxu0 0.0
        %1235 = vmatprep.subr.mxu0 0.0
        %1236 = vmatpush1.msra.mxu0 0.0
        %1237 = vmatprep.subr.mxu0 0.0
        %1238 = vmatpush1.msra.mxu0 0.0
        %1239 = vmatprep.subr.mxu0 0.0
        %1240 = vmatpush1.msra.mxu0 0.0
        %1241 = vmatprep.subr.mxu0 0.0
        %1242 = vmatpush1.msra.mxu0 0.0
        %1243 = vmatprep.mubr.f32.mxu0 0.0
        %1244 = vmatmul.mubr.f32.gmra.mrb[0].mxu0 %v1177
        %v1245 = vpop.f32.mrb[0].mxu0
        %v1246 = vadd.f32 0.0, %v1245
        %v1247 = vpop.f32.mrb[0].mxu0
        %1248 = vdwg.mxu0
        %v1249 = vld [vmem:[#allocation2] sm:$0x3]
        %v1250 = vadd.f32 %v1249, %v1246
        %1251 = vst [vmem:[#allocation2] sm:$0x3] %v1250
        %1252 = vmatprep.subr.mxu0 0.0
        %1253 = vmatpush1.msra.mxu0 %v1128
        %1254 = vmatprep.subr.mxu0 0.0
        %1255 = vmatpush1.msra.mxu0 %v1133
        %1256 = vmatprep.subr.mxu0 0.0
        %1257 = vmatpush1.msra.mxu0 0.0
        %1258 = vmatprep.subr.mxu0 0.0
        %1259 = vmatpush1.msra.mxu0 0.0
        %1260 = vmatprep.subr.mxu0 0.0
        %1261 = vmatpush1.msra.mxu0 0.0
        %1262 = vmatprep.subr.mxu0 0.0
        %1263 = vmatpush1.msra.mxu0 0.0
        %1264 = vmatprep.subr.mxu0 0.0
        %1265 = vmatpush1.msra.mxu0 0.0
        %1266 = vmatprep.subr.mxu0 0.0
        %1267 = vmatpush1.msra.mxu0 0.0
        %1268 = vmatprep.subr.mxu0 0.0
        %1269 = vmatpush1.msra.mxu0 0.0
        %1270 = vmatprep.subr.mxu0 0.0
        %1271 = vmatpush1.msra.mxu0 0.0
        %1272 = vmatprep.subr.mxu0 0.0
        %1273 = vmatpush1.msra.mxu0 0.0
        %1274 = vmatprep.subr.mxu0 0.0
        %1275 = vmatpush1.msra.mxu0 0.0
        %1276 = vmatprep.subr.mxu0 0.0
        %1277 = vmatpush1.msra.mxu0 0.0
        %1278 = vmatprep.subr.mxu0 0.0
        %1279 = vmatpush1.msra.mxu0 0.0
        %1280 = vmatprep.subr.mxu0 0.0
        %1281 = vmatpush1.msra.mxu0 0.0
        %1282 = vmatprep.subr.mxu0 0.0
        %1283 = vmatpush1.msra.mxu0 0.0
        %1284 = vmatprep.subr.mxu0 0.0
        %1285 = vmatpush1.msra.mxu0 0.0
        %1286 = vmatprep.subr.mxu0 0.0
        %1287 = vmatpush1.msra.mxu0 0.0
        %1288 = vmatprep.subr.mxu0 0.0
        %1289 = vmatpush1.msra.mxu0 0.0
        %1290 = vmatprep.subr.mxu0 0.0
        %1291 = vmatpush1.msra.mxu0 0.0
        %1292 = vmatprep.subr.mxu0 0.0
        %1293 = vmatpush1.msra.mxu0 0.0
        %1294 = vmatprep.subr.mxu0 0.0
        %1295 = vmatpush1.msra.mxu0 0.0
        %1296 = vmatprep.subr.mxu0 0.0
        %1297 = vmatpush1.msra.mxu0 0.0
        %1298 = vmatprep.subr.mxu0 0.0
        %1299 = vmatpush1.msra.mxu0 0.0
        %1300 = vmatprep.subr.mxu0 0.0
        %1301 = vmatpush1.msra.mxu0 0.0
        %1302 = vmatprep.subr.mxu0 0.0
        %1303 = vmatpush1.msra.mxu0 0.0
        %1304 = vmatprep.subr.mxu0 0.0
        %1305 = vmatpush1.msra.mxu0 0.0
        %1306 = vmatprep.subr.mxu0 0.0
        %1307 = vmatpush1.msra.mxu0 0.0
        %1308 = vmatprep.subr.mxu0 0.0
        %1309 = vmatpush1.msra.mxu0 0.0
        %1310 = vmatprep.subr.mxu0 0.0
        %1311 = vmatpush1.msra.mxu0 0.0
        %1312 = vmatprep.subr.mxu0 0.0
        %1313 = vmatpush1.msra.mxu0 0.0
        %1314 = vmatprep.subr.mxu0 0.0
        %1315 = vmatpush1.msra.mxu0 0.0
        %1316 = vmatprep.mubr.f32.mxu0 0.0
        %1317 = vmatmul.mubr.f32.gmra.mrb[0].mxu0 %v1177
        %v1318 = vpop.f32.mrb[0].mxu0
        %v1319 = vadd.f32 0.0, %v1318
        %v1320 = vpop.f32.mrb[0].mxu0
        %1321 = vdwg.mxu0
        %v1322 = vld [vmem:[#allocation2 + $0x2] sm:$0x3]
        %v1323 = vadd.f32 %v1322, %v1319
        %1324 = vst [vmem:[#allocation2 + $0x2] sm:$0x3] %v1323
        %1325 = vmatprep.subr.mxu0 0.0
        %1326 = vmatpush1.msra.mxu0 %v1138
        %1327 = vmatprep.subr.mxu0 0.0
        %1328 = vmatpush1.msra.mxu0 %v1143
        %1329 = vmatprep.subr.mxu0 0.0
        %1330 = vmatpush1.msra.mxu0 0.0
        %1331 = vmatprep.subr.mxu0 0.0
        %1332 = vmatpush1.msra.mxu0 0.0
        %1333 = vmatprep.subr.mxu0 0.0
        %1334 = vmatpush1.msra.mxu0 0.0
        %1335 = vmatprep.subr.mxu0 0.0
        %1336 = vmatpush1.msra.mxu0 0.0
        %1337 = vmatprep.subr.mxu0 0.0
        %1338 = vmatpush1.msra.mxu0 0.0
        %1339 = vmatprep.subr.mxu0 0.0
        %1340 = vmatpush1.msra.mxu0 0.0
        %1341 = vmatprep.subr.mxu0 0.0
        %1342 = vmatpush1.msra.mxu0 0.0
        %1343 = vmatprep.subr.mxu0 0.0
        %1344 = vmatpush1.msra.mxu0 0.0
        %1345 = vmatprep.subr.mxu0 0.0
        %1346 = vmatpush1.msra.mxu0 0.0
        %1347 = vmatprep.subr.mxu0 0.0
        %1348 = vmatpush1.msra.mxu0 0.0
        %1349 = vmatprep.subr.mxu0 0.0
        %1350 = vmatpush1.msra.mxu0 0.0
        %1351 = vmatprep.subr.mxu0 0.0
        %1352 = vmatpush1.msra.mxu0 0.0
        %1353 = vmatprep.subr.mxu0 0.0
        %1354 = vmatpush1.msra.mxu0 0.0
        %1355 = vmatprep.subr.mxu0 0.0
        %1356 = vmatpush1.msra.mxu0 0.0
        %1357 = vmatprep.subr.mxu0 0.0
        %1358 = vmatpush1.msra.mxu0 0.0
        %1359 = vmatprep.subr.mxu0 0.0
        %1360 = vmatpush1.msra.mxu0 0.0
        %1361 = vmatprep.subr.mxu0 0.0
        %1362 = vmatpush1.msra.mxu0 0.0
        %1363 = vmatprep.subr.mxu0 0.0
        %1364 = vmatpush1.msra.mxu0 0.0
        %1365 = vmatprep.subr.mxu0 0.0
        %1366 = vmatpush1.msra.mxu0 0.0
        %1367 = vmatprep.subr.mxu0 0.0
        %1368 = vmatpush1.msra.mxu0 0.0
        %1369 = vmatprep.subr.mxu0 0.0
        %1370 = vmatpush1.msra.mxu0 0.0
        %1371 = vmatprep.subr.mxu0 0.0
        %1372 = vmatpush1.msra.mxu0 0.0
        %1373 = vmatprep.subr.mxu0 0.0
        %1374 = vmatpush1.msra.mxu0 0.0
        %1375 = vmatprep.subr.mxu0 0.0
        %1376 = vmatpush1.msra.mxu0 0.0
        %1377 = vmatprep.subr.mxu0 0.0
        %1378 = vmatpush1.msra.mxu0 0.0
        %1379 = vmatprep.subr.mxu0 0.0
        %1380 = vmatpush1.msra.mxu0 0.0
        %1381 = vmatprep.subr.mxu0 0.0
        %1382 = vmatpush1.msra.mxu0 0.0
        %1383 = vmatprep.subr.mxu0 0.0
        %1384 = vmatpush1.msra.mxu0 0.0
        %1385 = vmatprep.subr.mxu0 0.0
        %1386 = vmatpush1.msra.mxu0 0.0
        %1387 = vmatprep.subr.mxu0 0.0
        %1388 = vmatpush1.msra.mxu0 0.0
        %1389 = vmatprep.mubr.f32.mxu0 0.0
        %1390 = vmatmul.mubr.f32.gmra.mrb[0].mxu0 %v1177
        %v1391 = vpop.f32.mrb[0].mxu0
        %v1392 = vadd.f32 0.0, %v1391
        %v1393 = vpop.f32.mrb[0].mxu0
        %1394 = vdwg.mxu0
        %v1395 = vld [vmem:[#allocation2 + $0x4] sm:$0x3]
        %v1396 = vadd.f32 %v1395, %v1392
        %1397 = vst [vmem:[#allocation2 + $0x4] sm:$0x3] %v1396
        %1398 = vmatprep.subr.mxu0 0.0
        %1399 = vmatpush1.msra.mxu0 %v1148
        %1400 = vmatprep.subr.mxu0 0.0
        %1401 = vmatpush1.msra.mxu0 %v1153
        %1402 = vmatprep.subr.mxu0 0.0
        %1403 = vmatpush1.msra.mxu0 0.0
        %1404 = vmatprep.subr.mxu0 0.0
        %1405 = vmatpush1.msra.mxu0 0.0
        %1406 = vmatprep.subr.mxu0 0.0
        %1407 = vmatpush1.msra.mxu0 0.0
        %1408 = vmatprep.subr.mxu0 0.0
        %1409 = vmatpush1.msra.mxu0 0.0
        %1410 = vmatprep.subr.mxu0 0.0
        %1411 = vmatpush1.msra.mxu0 0.0
        %1412 = vmatprep.subr.mxu0 0.0
        %1413 = vmatpush1.msra.mxu0 0.0
        %1414 = vmatprep.subr.mxu0 0.0
        %1415 = vmatpush1.msra.mxu0 0.0
        %1416 = vmatprep.subr.mxu0 0.0
        %1417 = vmatpush1.msra.mxu0 0.0
        %1418 = vmatprep.subr.mxu0 0.0
        %1419 = vmatpush1.msra.mxu0 0.0
        %1420 = vmatprep.subr.mxu0 0.0
        %1421 = vmatpush1.msra.mxu0 0.0
        %1422 = vmatprep.subr.mxu0 0.0
        %1423 = vmatpush1.msra.mxu0 0.0
        %1424 = vmatprep.subr.mxu0 0.0
        %1425 = vmatpush1.msra.mxu0 0.0
        %1426 = vmatprep.subr.mxu0 0.0
        %1427 = vmatpush1.msra.mxu0 0.0
        %1428 = vmatprep.subr.mxu0 0.0
        %1429 = vmatpush1.msra.mxu0 0.0
        %1430 = vmatprep.subr.mxu0 0.0
        %1431 = vmatpush1.msra.mxu0 0.0
        %1432 = vmatprep.subr.mxu0 0.0
        %1433 = vmatpush1.msra.mxu0 0.0
        %1434 = vmatprep.subr.mxu0 0.0
        %1435 = vmatpush1.msra.mxu0 0.0
        %1436 = vmatprep.subr.mxu0 0.0
        %1437 = vmatpush1.msra.mxu0 0.0
        %1438 = vmatprep.subr.mxu0 0.0
        %1439 = vmatpush1.msra.mxu0 0.0
        %1440 = vmatprep.subr.mxu0 0.0
        %1441 = vmatpush1.msra.mxu0 0.0
        %1442 = vmatprep.subr.mxu0 0.0
        %1443 = vmatpush1.msra.mxu0 0.0
        %1444 = vmatprep.subr.mxu0 0.0
        %1445 = vmatpush1.msra.mxu0 0.0
        %1446 = vmatprep.subr.mxu0 0.0
        %1447 = vmatpush1.msra.mxu0 0.0
        %1448 = vmatprep.subr.mxu0 0.0
        %1449 = vmatpush1.msra.mxu0 0.0
        %1450 = vmatprep.subr.mxu0 0.0
        %1451 = vmatpush1.msra.mxu0 0.0
        %1452 = vmatprep.subr.mxu0 0.0
        %1453 = vmatpush1.msra.mxu0 0.0
        %1454 = vmatprep.subr.mxu0 0.0
        %1455 = vmatpush1.msra.mxu0 0.0
        %1456 = vmatprep.subr.mxu0 0.0
        %1457 = vmatpush1.msra.mxu0 0.0
        %1458 = vmatprep.subr.mxu0 0.0
        %1459 = vmatpush1.msra.mxu0 0.0
        %1460 = vmatprep.subr.mxu0 0.0
        %1461 = vmatpush1.msra.mxu0 0.0
        %1462 = vmatprep.mubr.f32.mxu0 0.0
        %1463 = vmatmul.mubr.f32.gmra.mrb[0].mxu0 %v1177
        %v1464 = vpop.f32.mrb[0].mxu0
        %v1465 = vadd.f32 0.0, %v1464
        %v1466 = vpop.f32.mrb[0].mxu0
        %1467 = vdwg.mxu0
        %v1468 = vld [vmem:[#allocation2 + $0x6] sm:$0x3]
        %v1469 = vadd.f32 %v1468, %v1465
        %1470 = vst [vmem:[#allocation2 + $0x6] sm:$0x3] %v1469
        %1471 = vmatprep.subr.mxu0 0.0
        %1472 = vmatpush1.msra.mxu0 %v1158
        %1473 = vmatprep.subr.mxu0 0.0
        %1474 = vmatpush1.msra.mxu0 %v1163
        %1475 = vmatprep.subr.mxu0 0.0
        %1476 = vmatpush1.msra.mxu0 0.0
        %1477 = vmatprep.subr.mxu0 0.0
        %1478 = vmatpush1.msra.mxu0 0.0
        %1479 = vmatprep.subr.mxu0 0.0
        %1480 = vmatpush1.msra.mxu0 0.0
        %1481 = vmatprep.subr.mxu0 0.0
        %1482 = vmatpush1.msra.mxu0 0.0
        %1483 = vmatprep.subr.mxu0 0.0
        %1484 = vmatpush1.msra.mxu0 0.0
        %1485 = vmatprep.subr.mxu0 0.0
        %1486 = vmatpush1.msra.mxu0 0.0
        %1487 = vmatprep.subr.mxu0 0.0
        %1488 = vmatpush1.msra.mxu0 0.0
        %1489 = vmatprep.subr.mxu0 0.0
        %1490 = vmatpush1.msra.mxu0 0.0
        %1491 = vmatprep.subr.mxu0 0.0
        %1492 = vmatpush1.msra.mxu0 0.0
        %1493 = vmatprep.subr.mxu0 0.0
        %1494 = vmatpush1.msra.mxu0 0.0
        %1495 = vmatprep.subr.mxu0 0.0
        %1496 = vmatpush1.msra.mxu0 0.0
        %1497 = vmatprep.subr.mxu0 0.0
        %1498 = vmatpush1.msra.mxu0 0.0
        %1499 = vmatprep.subr.mxu0 0.0
        %1500 = vmatpush1.msra.mxu0 0.0
        %1501 = vmatprep.subr.mxu0 0.0
        %1502 = vmatpush1.msra.mxu0 0.0
        %1503 = vmatprep.subr.mxu0 0.0
        %1504 = vmatpush1.msra.mxu0 0.0
        %1505 = vmatprep.subr.mxu0 0.0
        %1506 = vmatpush1.msra.mxu0 0.0
        %1507 = vmatprep.subr.mxu0 0.0
        %1508 = vmatpush1.msra.mxu0 0.0
        %1509 = vmatprep.subr.mxu0 0.0
        %1510 = vmatpush1.msra.mxu0 0.0
        %1511 = vmatprep.subr.mxu0 0.0
        %1512 = vmatpush1.msra.mxu0 0.0
        %1513 = vmatprep.subr.mxu0 0.0
        %1514 = vmatpush1.msra.mxu0 0.0
        %1515 = vmatprep.subr.mxu0 0.0
        %1516 = vmatpush1.msra.mxu0 0.0
        %1517 = vmatprep.subr.mxu0 0.0
        %1518 = vmatpush1.msra.mxu0 0.0
        %1519 = vmatprep.subr.mxu0 0.0
        %1520 = vmatpush1.msra.mxu0 0.0
        %1521 = vmatprep.subr.mxu0 0.0
        %1522 = vmatpush1.msra.mxu0 0.0
        %1523 = vmatprep.subr.mxu0 0.0
        %1524 = vmatpush1.msra.mxu0 0.0
        %1525 = vmatprep.subr.mxu0 0.0
        %1526 = vmatpush1.msra.mxu0 0.0
        %1527 = vmatprep.subr.mxu0 0.0
        %1528 = vmatpush1.msra.mxu0 0.0
        %1529 = vmatprep.subr.mxu0 0.0
        %1530 = vmatpush1.msra.mxu0 0.0
        %1531 = vmatprep.subr.mxu0 0.0
        %1532 = vmatpush1.msra.mxu0 0.0
        %1533 = vmatprep.subr.mxu0 0.0
        %1534 = vmatpush1.msra.mxu0 0.0
        %1535 = vmatprep.mubr.f32.mxu0 0.0
        %1536 = vmatmul.mubr.f32.gmra.mrb[0].mxu0 %v1177
        %v1537 = vpop.f32.mrb[0].mxu0
        %v1538 = vadd.f32 0.0, %v1537
        %v1539 = vpop.f32.mrb[0].mxu0
        %1540 = vdwg.mxu0
        %v1541 = vld [vmem:[#allocation2 + $0x8] sm:$0x3]
        %v1542 = vadd.f32 %v1541, %v1538
        %1543 = vst [vmem:[#allocation2 + $0x8] sm:$0x3] %v1542
        %1544 = vmatprep.subr.mxu0 0.0
        %1545 = vmatpush1.msra.mxu0 %v1168
        %1546 = vmatprep.subr.mxu0 0.0
        %1547 = vmatpush1.msra.mxu0 %v1173
        %1548 = vmatprep.subr.mxu0 0.0
        %1549 = vmatpush1.msra.mxu0 0.0
        %1550 = vmatprep.subr.mxu0 0.0
        %1551 = vmatpush1.msra.mxu0 0.0
        %1552 = vmatprep.subr.mxu0 0.0
        %1553 = vmatpush1.msra.mxu0 0.0
        %1554 = vmatprep.subr.mxu0 0.0
        %1555 = vmatpush1.msra.mxu0 0.0
        %1556 = vmatprep.subr.mxu0 0.0
        %1557 = vmatpush1.msra.mxu0 0.0
        %1558 = vmatprep.subr.mxu0 0.0
        %1559 = vmatpush1.msra.mxu0 0.0
        %1560 = vmatprep.subr.mxu0 0.0
        %1561 = vmatpush1.msra.mxu0 0.0
        %1562 = vmatprep.subr.mxu0 0.0
        %1563 = vmatpush1.msra.mxu0 0.0
        %1564 = vmatprep.subr.mxu0 0.0
        %1565 = vmatpush1.msra.mxu0 0.0
        %1566 = vmatprep.subr.mxu0 0.0
        %1567 = vmatpush1.msra.mxu0 0.0
        %1568 = vmatprep.subr.mxu0 0.0
        %1569 = vmatpush1.msra.mxu0 0.0
        %1570 = vmatprep.subr.mxu0 0.0
        %1571 = vmatpush1.msra.mxu0 0.0
        %1572 = vmatprep.subr.mxu0 0.0
        %1573 = vmatpush1.msra.mxu0 0.0
        %1574 = vmatprep.subr.mxu0 0.0
        %1575 = vmatpush1.msra.mxu0 0.0
        %1576 = vmatprep.subr.mxu0 0.0
        %1577 = vmatpush1.msra.mxu0 0.0
        %1578 = vmatprep.subr.mxu0 0.0
        %1579 = vmatpush1.msra.mxu0 0.0
        %1580 = vmatprep.subr.mxu0 0.0
        %1581 = vmatpush1.msra.mxu0 0.0
        %1582 = vmatprep.subr.mxu0 0.0
        %1583 = vmatpush1.msra.mxu0 0.0
        %1584 = vmatprep.subr.mxu0 0.0
        %1585 = vmatpush1.msra.mxu0 0.0
        %1586 = vmatprep.subr.mxu0 0.0
        %1587 = vmatpush1.msra.mxu0 0.0
        %1588 = vmatprep.subr.mxu0 0.0
        %1589 = vmatpush1.msra.mxu0 0.0
        %1590 = vmatprep.subr.mxu0 0.0
        %1591 = vmatpush1.msra.mxu0 0.0
        %1592 = vmatprep.subr.mxu0 0.0
        %1593 = vmatpush1.msra.mxu0 0.0
        %1594 = vmatprep.subr.mxu0 0.0
        %1595 = vmatpush1.msra.mxu0 0.0
        %1596 = vmatprep.subr.mxu0 0.0
        %1597 = vmatpush1.msra.mxu0 0.0
        %1598 = vmatprep.subr.mxu0 0.0
        %1599 = vmatpush1.msra.mxu0 0.0
        %1600 = vmatprep.subr.mxu0 0.0
        %1601 = vmatpush1.msra.mxu0 0.0
        %1602 = vmatprep.subr.mxu0 0.0
        %1603 = vmatpush1.msra.mxu0 0.0
        %1604 = vmatprep.subr.mxu0 0.0
        %1605 = vmatpush1.msra.mxu0 0.0
        %1606 = vmatprep.subr.mxu0 0.0
        %1607 = vmatpush1.msra.mxu0 0.0
        %1608 = vmatprep.mubr.f32.mxu0 0.0
        %1609 = vmatmul.mubr.f32.gmra.mrb[0].mxu0 %v1177
        %v1610 = vpop.f32.mrb[0].mxu0
        %v1611 = vadd.f32 0.0, %v1610
        %v1612 = vpop.f32.mrb[0].mxu0
        %1613 = vdwg.mxu0
        %v1614 = vld [vmem:[#allocation2 + $0xa] sm:$0x3]
        %v1615 = vadd.f32 %v1614, %v1611
        %1616 = vst [vmem:[#allocation2 + $0xa] sm:$0x3] %v1615
        %s1617 = scalar_lea.vmem %s283, 256
        %v1618 = vld [vmem:[%s1617] sm:$0xff]
        %v1619 = vld [vmem:[%s1617 + $0x8] sm:$0xff]
        %v1620 = vld [vmem:[%s1617 + $0x10] sm:$0xff]
        %v1621 = vld [vmem:[%s1617 + $0x18] sm:$0xff]
        %v1622 = vld [vmem:[%s1617 + $0x20] sm:$0xff]
        %v1623 = vld [vmem:[%s1617 + $0x28] sm:$0xff]
        %v1624 = vld [vmem:[%s1617 + $0x30] sm:$0xff]
        %v1625 = vld [vmem:[%s1617 + $0x38] sm:$0xff]
        %v1626 = vld [vmem:[%s1617 + $0x40] sm:$0xff]
        %v1627 = vld [vmem:[%s1617 + $0x48] sm:$0xff]
        %v1628 = vld [vmem:[%s1617 + $0x50] sm:$0xff]
        %v1629 = vld [vmem:[%s1617 + $0x58] sm:$0xff]
        %v1630 = vld [vmem:[%s1617 + $0x60] sm:$0xff]
        %v1631 = vld [vmem:[%s1617 + $0x68] sm:$0xff]
        %v1632 = vld [vmem:[%s1617 + $0x70] sm:$0xff]
        %v1633 = vld [vmem:[%s1617 + $0x78] sm:$0xff]
        %s1634 = scalar_lea.vmem %s292, 4
        %v1635 = vld [vmem:[%s1634] sm:$0x3]
        %v1637 = vsel %vm332, %v1618, 0
        %v1640 = vsel %vm332, %v1619, 0
        %v1643 = vsel %vm332, %v1620, 0
        %v1646 = vsel %vm332, %v1621, 0
        %v1649 = vsel %vm332, %v1622, 0
        %v1652 = vsel %vm332, %v1623, 0
        %v1655 = vsel %vm332, %v1624, 0
        %v1658 = vsel %vm332, %v1625, 0
        %v1661 = vsel %vm332, %v1626, 0
        %v1664 = vsel %vm332, %v1627, 0
        %v1667 = vsel %vm332, %v1628, 0
        %v1670 = vsel %vm332, %v1629, 0
        %v1673 = vsel %vm332, %v1630, 0
        %v1676 = vsel %vm332, %v1631, 0
        %v1679 = vsel %vm332, %v1632, 0
        %v1682 = vsel %vm332, %v1633, 0
        %1684 = vmatprep.subr.mxu0 0.0
        %1685 = vmatpush1.xpose.msra.mxu0 %v1637
        %1686 = vmatprep.subr.mxu0 0.0
        %1687 = vmatpush1.xpose.msra.mxu0 %v1640
        %1688 = vmatprep.subr.mxu0 0.0
        %1689 = vmatpush1.xpose.msra.mxu0 %v1643
        %1690 = vmatprep.subr.mxu0 0.0
        %1691 = vmatpush1.xpose.msra.mxu0 %v1646
        %1692 = vmatprep.subr.mxu0 0.0
        %1693 = vmatpush1.xpose.msra.mxu0 %v1649
        %1694 = vmatprep.subr.mxu0 0.0
        %1695 = vmatpush1.xpose.msra.mxu0 %v1652
        %1696 = vmatprep.subr.mxu0 0.0
        %1697 = vmatpush1.xpose.msra.mxu0 %v1655
        %1698 = vmatprep.subr.mxu0 0.0
        %1699 = vmatpush1.xpose.msra.mxu0 %v1658
        %1700 = vmatprep.subr.mxu0 0.0
        %1701 = vmatpush1.xpose.msra.mxu0 %v1661
        %1702 = vmatprep.subr.mxu0 0.0
        %1703 = vmatpush1.xpose.msra.mxu0 %v1664
        %1704 = vmatprep.subr.mxu0 0.0
        %1705 = vmatpush1.xpose.msra.mxu0 %v1667
        %1706 = vmatprep.subr.mxu0 0.0
        %1707 = vmatpush1.xpose.msra.mxu0 %v1670
        %1708 = vmatprep.subr.mxu0 0.0
        %1709 = vmatpush1.xpose.msra.mxu0 %v1673
        %1710 = vmatprep.subr.mxu0 0.0
        %1711 = vmatpush1.xpose.msra.mxu0 %v1676
        %1712 = vmatprep.subr.mxu0 0.0
        %1713 = vmatpush1.xpose.msra.mxu0 %v1679
        %1714 = vmatprep.subr.mxu0 0.0
        %1715 = vmatpush1.xpose.msra.mxu0 %v1682
        %1716 = vmatprep.subr.mxu0 0.0
        %1717 = vmatpush1.xpose.msra.mxu0 0.0
        %1718 = vmatprep.subr.mxu0 0.0
        %1719 = vmatpush1.xpose.msra.mxu0 0.0
        %1720 = vmatprep.subr.mxu0 0.0
        %1721 = vmatpush1.xpose.msra.mxu0 0.0
        %1722 = vmatprep.subr.mxu0 0.0
        %1723 = vmatpush1.xpose.msra.mxu0 0.0
        %1724 = vmatprep.subr.mxu0 0.0
        %1725 = vmatpush1.xpose.msra.mxu0 0.0
        %1726 = vmatprep.subr.mxu0 0.0
        %1727 = vmatpush1.xpose.msra.mxu0 0.0
        %1728 = vmatprep.subr.mxu0 0.0
        %1729 = vmatpush1.xpose.msra.mxu0 0.0
        %1730 = vmatprep.subr.mxu0 0.0
        %1731 = vmatpush1.xpose.msra.mxu0 0.0
        %1732 = vmatprep.subr.mxu0 0.0
        %1733 = vmatpush1.xpose.msra.mxu0 0.0
        %1734 = vmatprep.subr.mxu0 0.0
        %1735 = vmatpush1.xpose.msra.mxu0 0.0
        %1736 = vmatprep.subr.mxu0 0.0
        %1737 = vmatpush1.xpose.msra.mxu0 0.0
        %1738 = vmatprep.subr.mxu0 0.0
        %1739 = vmatpush1.xpose.msra.mxu0 0.0
        %1740 = vmatprep.subr.mxu0 0.0
        %1741 = vmatpush1.xpose.msra.mxu0 0.0
        %1742 = vmatprep.subr.mxu0 0.0
        %1743 = vmatpush1.xpose.msra.mxu0 0.0
        %1744 = vmatprep.subr.mxu0 0.0
        %1745 = vmatpush1.xpose.msra.mxu0 0.0
        %1746 = vmatprep.subr.mxu0 0.0
        %1747 = vmatpush1.xpose.msra.mxu0 0.0
        %1748 = vmatprep.mubr.f32.mxu0 0.0
        %1749 = vmatmul.mubr.f32.gmra.mrb[0].mxu0 %v334
        %v1750 = vpop.f32.mrb[0].mxu0
        %v1751 = vadd.f32 0.0, %v1750
        %v1752 = vpop.f32.mrb[0].mxu0
        %1753 = vmatprep.mubr.f32.mxu0 0.0
        %1754 = vmatmul.mubr.f32.gmra.mrb[0].mxu0 %v337
        %v1755 = vpop.f32.mrb[0].mxu0
        %v1756 = vadd.f32 0.0, %v1755
        %v1757 = vpop.f32.mrb[0].mxu0
        %1758 = vmatprep.mubr.f32.mxu0 0.0
        %1759 = vmatmul.mubr.f32.gmra.mrb[0].mxu0 %v340
        %v1760 = vpop.f32.mrb[0].mxu0
        %v1761 = vadd.f32 0.0, %v1760
        %v1762 = vpop.f32.mrb[0].mxu0
        %1763 = vmatprep.mubr.f32.mxu0 0.0
        %1764 = vmatmul.mubr.f32.gmra.mrb[0].mxu0 %v343
        %v1765 = vpop.f32.mrb[0].mxu0
        %v1766 = vadd.f32 0.0, %v1765
        %v1767 = vpop.f32.mrb[0].mxu0
        %1768 = vmatprep.mubr.f32.mxu0 0.0
        %1769 = vmatmul.mubr.f32.gmra.mrb[0].mxu0 %v346
        %v1770 = vpop.f32.mrb[0].mxu0
        %v1771 = vadd.f32 0.0, %v1770
        %v1772 = vpop.f32.mrb[0].mxu0
        %1773 = vmatprep.mubr.f32.mxu0 0.0
        %1774 = vmatmul.mubr.f32.gmra.mrb[0].mxu0 %v349
        %v1775 = vpop.f32.mrb[0].mxu0
        %v1776 = vadd.f32 0.0, %v1775
        %v1777 = vpop.f32.mrb[0].mxu0
        %1778 = vmatprep.mubr.f32.mxu0 0.0
        %1779 = vmatmul.mubr.f32.gmra.mrb[0].mxu0 %v352
        %v1780 = vpop.f32.mrb[0].mxu0
        %v1781 = vadd.f32 0.0, %v1780
        %v1782 = vpop.f32.mrb[0].mxu0
        %1783 = vmatprep.mubr.f32.mxu0 0.0
        %1784 = vmatmul.mubr.f32.gmra.mrb[0].mxu0 %v355
        %v1785 = vpop.f32.mrb[0].mxu0
        %v1786 = vadd.f32 0.0, %v1785
        %v1787 = vpop.f32.mrb[0].mxu0
        %1788 = vmatprep.mubr.f32.mxu0 0.0
        %1789 = vmatmul.mubr.f32.gmra.mrb[0].mxu0 %v358
        %v1790 = vpop.f32.mrb[0].mxu0
        %v1791 = vadd.f32 0.0, %v1790
        %v1792 = vpop.f32.mrb[0].mxu0
        %1793 = vmatprep.mubr.f32.mxu0 0.0
        %1794 = vmatmul.mubr.f32.gmra.mrb[0].mxu0 %v361
        %v1795 = vpop.f32.mrb[0].mxu0
        %v1796 = vadd.f32 0.0, %v1795
        %v1797 = vpop.f32.mrb[0].mxu0
        %1798 = vmatprep.mubr.f32.mxu0 0.0
        %1799 = vmatmul.mubr.f32.gmra.mrb[0].mxu0 %v364
        %v1800 = vpop.f32.mrb[0].mxu0
        %v1801 = vadd.f32 0.0, %v1800
        %v1802 = vpop.f32.mrb[0].mxu0
        %1803 = vmatprep.mubr.f32.mxu0 0.0
        %1804 = vmatmul.mubr.f32.gmra.mrb[0].mxu0 %v367
        %v1805 = vpop.f32.mrb[0].mxu0
        %v1806 = vadd.f32 0.0, %v1805
        %v1807 = vpop.f32.mrb[0].mxu0
        %1808 = vdwg.mxu0
        %v1810 = vsel %vm542, %v1635, 0
        %1812 = vmatprep.subr.mxu0 0.0
        %1813 = vmatpush1.msra.mxu0 %v1751
        %1814 = vmatprep.subr.mxu0 0.0
        %1815 = vmatpush1.msra.mxu0 %v1756
        %1816 = vmatprep.subr.mxu0 0.0
        %1817 = vmatpush1.msra.mxu0 0.0
        %1818 = vmatprep.subr.mxu0 0.0
        %1819 = vmatpush1.msra.mxu0 0.0
        %1820 = vmatprep.subr.mxu0 0.0
        %1821 = vmatpush1.msra.mxu0 0.0
        %1822 = vmatprep.subr.mxu0 0.0
        %1823 = vmatpush1.msra.mxu0 0.0
        %1824 = vmatprep.subr.mxu0 0.0
        %1825 = vmatpush1.msra.mxu0 0.0
        %1826 = vmatprep.subr.mxu0 0.0
        %1827 = vmatpush1.msra.mxu0 0.0
        %1828 = vmatprep.subr.mxu0 0.0
        %1829 = vmatpush1.msra.mxu0 0.0
        %1830 = vmatprep.subr.mxu0 0.0
        %1831 = vmatpush1.msra.mxu0 0.0
        %1832 = vmatprep.subr.mxu0 0.0
        %1833 = vmatpush1.msra.mxu0 0.0
        %1834 = vmatprep.subr.mxu0 0.0
        %1835 = vmatpush1.msra.mxu0 0.0
        %1836 = vmatprep.subr.mxu0 0.0
        %1837 = vmatpush1.msra.mxu0 0.0
        %1838 = vmatprep.subr.mxu0 0.0
        %1839 = vmatpush1.msra.mxu0 0.0
        %1840 = vmatprep.subr.mxu0 0.0
        %1841 = vmatpush1.msra.mxu0 0.0
        %1842 = vmatprep.subr.mxu0 0.0
        %1843 = vmatpush1.msra.mxu0 0.0
        %1844 = vmatprep.subr.mxu0 0.0
        %1845 = vmatpush1.msra.mxu0 0.0
        %1846 = vmatprep.subr.mxu0 0.0
        %1847 = vmatpush1.msra.mxu0 0.0
        %1848 = vmatprep.subr.mxu0 0.0
        %1849 = vmatpush1.msra.mxu0 0.0
        %1850 = vmatprep.subr.mxu0 0.0
        %1851 = vmatpush1.msra.mxu0 0.0
        %1852 = vmatprep.subr.mxu0 0.0
        %1853 = vmatpush1.msra.mxu0 0.0
        %1854 = vmatprep.subr.mxu0 0.0
        %1855 = vmatpush1.msra.mxu0 0.0
        %1856 = vmatprep.subr.mxu0 0.0
        %1857 = vmatpush1.msra.mxu0 0.0
        %1858 = vmatprep.subr.mxu0 0.0
        %1859 = vmatpush1.msra.mxu0 0.0
        %1860 = vmatprep.subr.mxu0 0.0
        %1861 = vmatpush1.msra.mxu0 0.0
        %1862 = vmatprep.subr.mxu0 0.0
        %1863 = vmatpush1.msra.mxu0 0.0
        %1864 = vmatprep.subr.mxu0 0.0
        %1865 = vmatpush1.msra.mxu0 0.0
        %1866 = vmatprep.subr.mxu0 0.0
        %1867 = vmatpush1.msra.mxu0 0.0
        %1868 = vmatprep.subr.mxu0 0.0
        %1869 = vmatpush1.msra.mxu0 0.0
        %1870 = vmatprep.subr.mxu0 0.0
        %1871 = vmatpush1.msra.mxu0 0.0
        %1872 = vmatprep.subr.mxu0 0.0
        %1873 = vmatpush1.msra.mxu0 0.0
        %1874 = vmatprep.subr.mxu0 0.0
        %1875 = vmatpush1.msra.mxu0 0.0
        %1876 = vmatprep.mubr.f32.mxu0 0.0
        %1877 = vmatmul.mubr.f32.gmra.mrb[0].mxu0 %v1810
        %v1878 = vpop.f32.mrb[0].mxu0
        %v1879 = vadd.f32 0.0, %v1878
        %v1880 = vpop.f32.mrb[0].mxu0
        %1881 = vdwg.mxu0
        %v1882 = vld [vmem:[#allocation2] sm:$0x3]
        %v1883 = vadd.f32 %v1882, %v1879
        %1884 = vst [vmem:[#allocation2] sm:$0x3] %v1883
        %1885 = vmatprep.subr.mxu0 0.0
        %1886 = vmatpush1.msra.mxu0 %v1761
        %1887 = vmatprep.subr.mxu0 0.0
        %1888 = vmatpush1.msra.mxu0 %v1766
        %1889 = vmatprep.subr.mxu0 0.0
        %1890 = vmatpush1.msra.mxu0 0.0
        %1891 = vmatprep.subr.mxu0 0.0
        %1892 = vmatpush1.msra.mxu0 0.0
        %1893 = vmatprep.subr.mxu0 0.0
        %1894 = vmatpush1.msra.mxu0 0.0
        %1895 = vmatprep.subr.mxu0 0.0
        %1896 = vmatpush1.msra.mxu0 0.0
        %1897 = vmatprep.subr.mxu0 0.0
        %1898 = vmatpush1.msra.mxu0 0.0
        %1899 = vmatprep.subr.mxu0 0.0
        %1900 = vmatpush1.msra.mxu0 0.0
        %1901 = vmatprep.subr.mxu0 0.0
        %1902 = vmatpush1.msra.mxu0 0.0
        %1903 = vmatprep.subr.mxu0 0.0
        %1904 = vmatpush1.msra.mxu0 0.0
        %1905 = vmatprep.subr.mxu0 0.0
        %1906 = vmatpush1.msra.mxu0 0.0
        %1907 = vmatprep.subr.mxu0 0.0
        %1908 = vmatpush1.msra.mxu0 0.0
        %1909 = vmatprep.subr.mxu0 0.0
        %1910 = vmatpush1.msra.mxu0 0.0
        %1911 = vmatprep.subr.mxu0 0.0
        %1912 = vmatpush1.msra.mxu0 0.0
        %1913 = vmatprep.subr.mxu0 0.0
        %1914 = vmatpush1.msra.mxu0 0.0
        %1915 = vmatprep.subr.mxu0 0.0
        %1916 = vmatpush1.msra.mxu0 0.0
        %1917 = vmatprep.subr.mxu0 0.0
        %1918 = vmatpush1.msra.mxu0 0.0
        %1919 = vmatprep.subr.mxu0 0.0
        %1920 = vmatpush1.msra.mxu0 0.0
        %1921 = vmatprep.subr.mxu0 0.0
        %1922 = vmatpush1.msra.mxu0 0.0
        %1923 = vmatprep.subr.mxu0 0.0
        %1924 = vmatpush1.msra.mxu0 0.0
        %1925 = vmatprep.subr.mxu0 0.0
        %1926 = vmatpush1.msra.mxu0 0.0
        %1927 = vmatprep.subr.mxu0 0.0
        %1928 = vmatpush1.msra.mxu0 0.0
        %1929 = vmatprep.subr.mxu0 0.0
        %1930 = vmatpush1.msra.mxu0 0.0
        %1931 = vmatprep.subr.mxu0 0.0
        %1932 = vmatpush1.msra.mxu0 0.0
        %1933 = vmatprep.subr.mxu0 0.0
        %1934 = vmatpush1.msra.mxu0 0.0
        %1935 = vmatprep.subr.mxu0 0.0
        %1936 = vmatpush1.msra.mxu0 0.0
        %1937 = vmatprep.subr.mxu0 0.0
        %1938 = vmatpush1.msra.mxu0 0.0
        %1939 = vmatprep.subr.mxu0 0.0
        %1940 = vmatpush1.msra.mxu0 0.0
        %1941 = vmatprep.subr.mxu0 0.0
        %1942 = vmatpush1.msra.mxu0 0.0
        %1943 = vmatprep.subr.mxu0 0.0
        %1944 = vmatpush1.msra.mxu0 0.0
        %1945 = vmatprep.subr.mxu0 0.0
        %1946 = vmatpush1.msra.mxu0 0.0
        %1947 = vmatprep.subr.mxu0 0.0
        %1948 = vmatpush1.msra.mxu0 0.0
        %1949 = vmatprep.mubr.f32.mxu0 0.0
        %1950 = vmatmul.mubr.f32.gmra.mrb[0].mxu0 %v1810
        %v1951 = vpop.f32.mrb[0].mxu0
        %v1952 = vadd.f32 0.0, %v1951
        %v1953 = vpop.f32.mrb[0].mxu0
        %1954 = vdwg.mxu0
        %v1955 = vld [vmem:[#allocation2 + $0x2] sm:$0x3]
        %v1956 = vadd.f32 %v1955, %v1952
        %1957 = vst [vmem:[#allocation2 + $0x2] sm:$0x3] %v1956
        %1958 = vmatprep.subr.mxu0 0.0
        %1959 = vmatpush1.msra.mxu0 %v1771
        %1960 = vmatprep.subr.mxu0 0.0
        %1961 = vmatpush1.msra.mxu0 %v1776
        %1962 = vmatprep.subr.mxu0 0.0
        %1963 = vmatpush1.msra.mxu0 0.0
        %1964 = vmatprep.subr.mxu0 0.0
        %1965 = vmatpush1.msra.mxu0 0.0
        %1966 = vmatprep.subr.mxu0 0.0
        %1967 = vmatpush1.msra.mxu0 0.0
        %1968 = vmatprep.subr.mxu0 0.0
        %1969 = vmatpush1.msra.mxu0 0.0
        %1970 = vmatprep.subr.mxu0 0.0
        %1971 = vmatpush1.msra.mxu0 0.0
        %1972 = vmatprep.subr.mxu0 0.0
        %1973 = vmatpush1.msra.mxu0 0.0
        %1974 = vmatprep.subr.mxu0 0.0
        %1975 = vmatpush1.msra.mxu0 0.0
        %1976 = vmatprep.subr.mxu0 0.0
        %1977 = vmatpush1.msra.mxu0 0.0
        %1978 = vmatprep.subr.mxu0 0.0
        %1979 = vmatpush1.msra.mxu0 0.0
        %1980 = vmatprep.subr.mxu0 0.0
        %1981 = vmatpush1.msra.mxu0 0.0
        %1982 = vmatprep.subr.mxu0 0.0
        %1983 = vmatpush1.msra.mxu0 0.0
        %1984 = vmatprep.subr.mxu0 0.0
        %1985 = vmatpush1.msra.mxu0 0.0
        %1986 = vmatprep.subr.mxu0 0.0
        %1987 = vmatpush1.msra.mxu0 0.0
        %1988 = vmatprep.subr.mxu0 0.0
        %1989 = vmatpush1.msra.mxu0 0.0
        %1990 = vmatprep.subr.mxu0 0.0
        %1991 = vmatpush1.msra.mxu0 0.0
        %1992 = vmatprep.subr.mxu0 0.0
        %1993 = vmatpush1.msra.mxu0 0.0
        %1994 = vmatprep.subr.mxu0 0.0
        %1995 = vmatpush1.msra.mxu0 0.0
        %1996 = vmatprep.subr.mxu0 0.0
        %1997 = vmatpush1.msra.mxu0 0.0
        %1998 = vmatprep.subr.mxu0 0.0
        %1999 = vmatpush1.msra.mxu0 0.0
        %2000 = vmatprep.subr.mxu0 0.0
        %2001 = vmatpush1.msra.mxu0 0.0
        %2002 = vmatprep.subr.mxu0 0.0
        %2003 = vmatpush1.msra.mxu0 0.0
        %2004 = vmatprep.subr.mxu0 0.0
        %2005 = vmatpush1.msra.mxu0 0.0
        %2006 = vmatprep.subr.mxu0 0.0
        %2007 = vmatpush1.msra.mxu0 0.0
        %2008 = vmatprep.subr.mxu0 0.0
        %2009 = vmatpush1.msra.mxu0 0.0
        %2010 = vmatprep.subr.mxu0 0.0
        %2011 = vmatpush1.msra.mxu0 0.0
        %2012 = vmatprep.subr.mxu0 0.0
        %2013 = vmatpush1.msra.mxu0 0.0
        %2014 = vmatprep.subr.mxu0 0.0
        %2015 = vmatpush1.msra.mxu0 0.0
        %2016 = vmatprep.subr.mxu0 0.0
        %2017 = vmatpush1.msra.mxu0 0.0
        %2018 = vmatprep.subr.mxu0 0.0
        %2019 = vmatpush1.msra.mxu0 0.0
        %2020 = vmatprep.subr.mxu0 0.0
        %2021 = vmatpush1.msra.mxu0 0.0
        %2022 = vmatprep.mubr.f32.mxu0 0.0
        %2023 = vmatmul.mubr.f32.gmra.mrb[0].mxu0 %v1810
        %v2024 = vpop.f32.mrb[0].mxu0
        %v2025 = vadd.f32 0.0, %v2024
        %v2026 = vpop.f32.mrb[0].mxu0
        %2027 = vdwg.mxu0
        %v2028 = vld [vmem:[#allocation2 + $0x4] sm:$0x3]
        %v2029 = vadd.f32 %v2028, %v2025
        %2030 = vst [vmem:[#allocation2 + $0x4] sm:$0x3] %v2029
        %2031 = vmatprep.subr.mxu0 0.0
        %2032 = vmatpush1.msra.mxu0 %v1781
        %2033 = vmatprep.subr.mxu0 0.0
        %2034 = vmatpush1.msra.mxu0 %v1786
        %2035 = vmatprep.subr.mxu0 0.0
        %2036 = vmatpush1.msra.mxu0 0.0
        %2037 = vmatprep.subr.mxu0 0.0
        %2038 = vmatpush1.msra.mxu0 0.0
        %2039 = vmatprep.subr.mxu0 0.0
        %2040 = vmatpush1.msra.mxu0 0.0
        %2041 = vmatprep.subr.mxu0 0.0
        %2042 = vmatpush1.msra.mxu0 0.0
        %2043 = vmatprep.subr.mxu0 0.0
        %2044 = vmatpush1.msra.mxu0 0.0
        %2045 = vmatprep.subr.mxu0 0.0
        %2046 = vmatpush1.msra.mxu0 0.0
        %2047 = vmatprep.subr.mxu0 0.0
        %2048 = vmatpush1.msra.mxu0 0.0
        %2049 = vmatprep.subr.mxu0 0.0
        %2050 = vmatpush1.msra.mxu0 0.0
        %2051 = vmatprep.subr.mxu0 0.0
        %2052 = vmatpush1.msra.mxu0 0.0
        %2053 = vmatprep.subr.mxu0 0.0
        %2054 = vmatpush1.msra.mxu0 0.0
        %2055 = vmatprep.subr.mxu0 0.0
        %2056 = vmatpush1.msra.mxu0 0.0
        %2057 = vmatprep.subr.mxu0 0.0
        %2058 = vmatpush1.msra.mxu0 0.0
        %2059 = vmatprep.subr.mxu0 0.0
        %2060 = vmatpush1.msra.mxu0 0.0
        %2061 = vmatprep.subr.mxu0 0.0
        %2062 = vmatpush1.msra.mxu0 0.0
        %2063 = vmatprep.subr.mxu0 0.0
        %2064 = vmatpush1.msra.mxu0 0.0
        %2065 = vmatprep.subr.mxu0 0.0
        %2066 = vmatpush1.msra.mxu0 0.0
        %2067 = vmatprep.subr.mxu0 0.0
        %2068 = vmatpush1.msra.mxu0 0.0
        %2069 = vmatprep.subr.mxu0 0.0
        %2070 = vmatpush1.msra.mxu0 0.0
        %2071 = vmatprep.subr.mxu0 0.0
        %2072 = vmatpush1.msra.mxu0 0.0
        %2073 = vmatprep.subr.mxu0 0.0
        %2074 = vmatpush1.msra.mxu0 0.0
        %2075 = vmatprep.subr.mxu0 0.0
        %2076 = vmatpush1.msra.mxu0 0.0
        %2077 = vmatprep.subr.mxu0 0.0
        %2078 = vmatpush1.msra.mxu0 0.0
        %2079 = vmatprep.subr.mxu0 0.0
        %2080 = vmatpush1.msra.mxu0 0.0
        %2081 = vmatprep.subr.mxu0 0.0
        %2082 = vmatpush1.msra.mxu0 0.0
        %2083 = vmatprep.subr.mxu0 0.0
        %2084 = vmatpush1.msra.mxu0 0.0
        %2085 = vmatprep.subr.mxu0 0.0
        %2086 = vmatpush1.msra.mxu0 0.0
        %2087 = vmatprep.subr.mxu0 0.0
        %2088 = vmatpush1.msra.mxu0 0.0
        %2089 = vmatprep.subr.mxu0 0.0
        %2090 = vmatpush1.msra.mxu0 0.0
        %2091 = vmatprep.subr.mxu0 0.0
        %2092 = vmatpush1.msra.mxu0 0.0
        %2093 = vmatprep.subr.mxu0 0.0
        %2094 = vmatpush1.msra.mxu0 0.0
        %2095 = vmatprep.mubr.f32.mxu0 0.0
        %2096 = vmatmul.mubr.f32.gmra.mrb[0].mxu0 %v1810
        %v2097 = vpop.f32.mrb[0].mxu0
        %v2098 = vadd.f32 0.0, %v2097
        %v2099 = vpop.f32.mrb[0].mxu0
        %2100 = vdwg.mxu0
        %v2101 = vld [vmem:[#allocation2 + $0x6] sm:$0x3]
        %v2102 = vadd.f32 %v2101, %v2098
        %2103 = vst [vmem:[#allocation2 + $0x6] sm:$0x3] %v2102
        %2104 = vmatprep.subr.mxu0 0.0
        %2105 = vmatpush1.msra.mxu0 %v1791
        %2106 = vmatprep.subr.mxu0 0.0
        %2107 = vmatpush1.msra.mxu0 %v1796
        %2108 = vmatprep.subr.mxu0 0.0
        %2109 = vmatpush1.msra.mxu0 0.0
        %2110 = vmatprep.subr.mxu0 0.0
        %2111 = vmatpush1.msra.mxu0 0.0
        %2112 = vmatprep.subr.mxu0 0.0
        %2113 = vmatpush1.msra.mxu0 0.0
        %2114 = vmatprep.subr.mxu0 0.0
        %2115 = vmatpush1.msra.mxu0 0.0
        %2116 = vmatprep.subr.mxu0 0.0
        %2117 = vmatpush1.msra.mxu0 0.0
        %2118 = vmatprep.subr.mxu0 0.0
        %2119 = vmatpush1.msra.mxu0 0.0
        %2120 = vmatprep.subr.mxu0 0.0
        %2121 = vmatpush1.msra.mxu0 0.0
        %2122 = vmatprep.subr.mxu0 0.0
        %2123 = vmatpush1.msra.mxu0 0.0
        %2124 = vmatprep.subr.mxu0 0.0
        %2125 = vmatpush1.msra.mxu0 0.0
        %2126 = vmatprep.subr.mxu0 0.0
        %2127 = vmatpush1.msra.mxu0 0.0
        %2128 = vmatprep.subr.mxu0 0.0
        %2129 = vmatpush1.msra.mxu0 0.0
        %2130 = vmatprep.subr.mxu0 0.0
        %2131 = vmatpush1.msra.mxu0 0.0
        %2132 = vmatprep.subr.mxu0 0.0
        %2133 = vmatpush1.msra.mxu0 0.0
        %2134 = vmatprep.subr.mxu0 0.0
        %2135 = vmatpush1.msra.mxu0 0.0
        %2136 = vmatprep.subr.mxu0 0.0
        %2137 = vmatpush1.msra.mxu0 0.0
        %2138 = vmatprep.subr.mxu0 0.0
        %2139 = vmatpush1.msra.mxu0 0.0
        %2140 = vmatprep.subr.mxu0 0.0
        %2141 = vmatpush1.msra.mxu0 0.0
        %2142 = vmatprep.subr.mxu0 0.0
        %2143 = vmatpush1.msra.mxu0 0.0
        %2144 = vmatprep.subr.mxu0 0.0
        %2145 = vmatpush1.msra.mxu0 0.0
        %2146 = vmatprep.subr.mxu0 0.0
        %2147 = vmatpush1.msra.mxu0 0.0
        %2148 = vmatprep.subr.mxu0 0.0
        %2149 = vmatpush1.msra.mxu0 0.0
        %2150 = vmatprep.subr.mxu0 0.0
        %2151 = vmatpush1.msra.mxu0 0.0
        %2152 = vmatprep.subr.mxu0 0.0
        %2153 = vmatpush1.msra.mxu0 0.0
        %2154 = vmatprep.subr.mxu0 0.0
        %2155 = vmatpush1.msra.mxu0 0.0
        %2156 = vmatprep.subr.mxu0 0.0
        %2157 = vmatpush1.msra.mxu0 0.0
        %2158 = vmatprep.subr.mxu0 0.0
        %2159 = vmatpush1.msra.mxu0 0.0
        %2160 = vmatprep.subr.mxu0 0.0
        %2161 = vmatpush1.msra.mxu0 0.0
        %2162 = vmatprep.subr.mxu0 0.0
        %2163 = vmatpush1.msra.mxu0 0.0
        %2164 = vmatprep.subr.mxu0 0.0
        %2165 = vmatpush1.msra.mxu0 0.0
        %2166 = vmatprep.subr.mxu0 0.0
        %2167 = vmatpush1.msra.mxu0 0.0
        %2168 = vmatprep.mubr.f32.mxu0 0.0
        %2169 = vmatmul.mubr.f32.gmra.mrb[0].mxu0 %v1810
        %v2170 = vpop.f32.mrb[0].mxu0
        %v2171 = vadd.f32 0.0, %v2170
        %v2172 = vpop.f32.mrb[0].mxu0
        %2173 = vdwg.mxu0
        %v2174 = vld [vmem:[#allocation2 + $0x8] sm:$0x3]
        %v2175 = vadd.f32 %v2174, %v2171
        %2176 = vst [vmem:[#allocation2 + $0x8] sm:$0x3] %v2175
        %2177 = vmatprep.subr.mxu0 0.0
        %2178 = vmatpush1.msra.mxu0 %v1801
        %2179 = vmatprep.subr.mxu0 0.0
        %2180 = vmatpush1.msra.mxu0 %v1806
        %2181 = vmatprep.subr.mxu0 0.0
        %2182 = vmatpush1.msra.mxu0 0.0
        %2183 = vmatprep.subr.mxu0 0.0
        %2184 = vmatpush1.msra.mxu0 0.0
        %2185 = vmatprep.subr.mxu0 0.0
        %2186 = vmatpush1.msra.mxu0 0.0
        %2187 = vmatprep.subr.mxu0 0.0
        %2188 = vmatpush1.msra.mxu0 0.0
        %2189 = vmatprep.subr.mxu0 0.0
        %2190 = vmatpush1.msra.mxu0 0.0
        %2191 = vmatprep.subr.mxu0 0.0
        %2192 = vmatpush1.msra.mxu0 0.0
        %2193 = vmatprep.subr.mxu0 0.0
        %2194 = vmatpush1.msra.mxu0 0.0
        %2195 = vmatprep.subr.mxu0 0.0
        %2196 = vmatpush1.msra.mxu0 0.0
        %2197 = vmatprep.subr.mxu0 0.0
        %2198 = vmatpush1.msra.mxu0 0.0
        %2199 = vmatprep.subr.mxu0 0.0
        %2200 = vmatpush1.msra.mxu0 0.0
        %2201 = vmatprep.subr.mxu0 0.0
        %2202 = vmatpush1.msra.mxu0 0.0
        %2203 = vmatprep.subr.mxu0 0.0
        %2204 = vmatpush1.msra.mxu0 0.0
        %2205 = vmatprep.subr.mxu0 0.0
        %2206 = vmatpush1.msra.mxu0 0.0
        %2207 = vmatprep.subr.mxu0 0.0
        %2208 = vmatpush1.msra.mxu0 0.0
        %2209 = vmatprep.subr.mxu0 0.0
        %2210 = vmatpush1.msra.mxu0 0.0
        %2211 = vmatprep.subr.mxu0 0.0
        %2212 = vmatpush1.msra.mxu0 0.0
        %2213 = vmatprep.subr.mxu0 0.0
        %2214 = vmatpush1.msra.mxu0 0.0
        %2215 = vmatprep.subr.mxu0 0.0
        %2216 = vmatpush1.msra.mxu0 0.0
        %2217 = vmatprep.subr.mxu0 0.0
        %2218 = vmatpush1.msra.mxu0 0.0
        %2219 = vmatprep.subr.mxu0 0.0
        %2220 = vmatpush1.msra.mxu0 0.0
        %2221 = vmatprep.subr.mxu0 0.0
        %2222 = vmatpush1.msra.mxu0 0.0
        %2223 = vmatprep.subr.mxu0 0.0
        %2224 = vmatpush1.msra.mxu0 0.0
        %2225 = vmatprep.subr.mxu0 0.0
        %2226 = vmatpush1.msra.mxu0 0.0
        %2227 = vmatprep.subr.mxu0 0.0
        %2228 = vmatpush1.msra.mxu0 0.0
        %2229 = vmatprep.subr.mxu0 0.0
        %2230 = vmatpush1.msra.mxu0 0.0
        %2231 = vmatprep.subr.mxu0 0.0
        %2232 = vmatpush1.msra.mxu0 0.0
        %2233 = vmatprep.subr.mxu0 0.0
        %2234 = vmatpush1.msra.mxu0 0.0
        %2235 = vmatprep.subr.mxu0 0.0
        %2236 = vmatpush1.msra.mxu0 0.0
        %2237 = vmatprep.subr.mxu0 0.0
        %2238 = vmatpush1.msra.mxu0 0.0
        %2239 = vmatprep.subr.mxu0 0.0
        %2240 = vmatpush1.msra.mxu0 0.0
        %2241 = vmatprep.mubr.f32.mxu0 0.0
        %2242 = vmatmul.mubr.f32.gmra.mrb[0].mxu0 %v1810
        %v2243 = vpop.f32.mrb[0].mxu0
        %v2244 = vadd.f32 0.0, %v2243
        %v2245 = vpop.f32.mrb[0].mxu0
        %2246 = vdwg.mxu0
        %v2247 = vld [vmem:[#allocation2 + $0xa] sm:$0x3]
        %v2248 = vadd.f32 %v2247, %v2244
        %2249 = vst [vmem:[#allocation2 + $0xa] sm:$0x3] %v2248
        %p2250 = scmp.eq.s32.totalorder %s25, 1
        %p2251 = pnand %p295, %p2250
        %p2252 = pneg %p2251
        // Predicated region
        $region41: #{tpu_custom_call.1} parent=35 // pred_check
          _
        $region42: #{tpu_custom_call.1} parent=35 // pred_check_branch
          %2254 = sbr.rel (%p2251) target = $region44
        $region43: #{tpu_custom_call.1} parent=35 // pred_region
          %v2255 = vld [vmem:[#allocation2] sm:$0xff]
          %v2256 = vld [vmem:[#allocation2 + $0x8] sm:$0xf]
          %v2257 = vld [vmem:[%s3] sm:$0x3f]
          %v2259 = vlaneseq
          %v2260 = vshrl.u32 %v2259, 7
          %v2261 = vsub.s32 0, %v2260
          %v2262 = vrot.slane %v2257, %v2261
          %v2263 = vlaneseq
          %v2264 = vshrl.u32 %v2263, 7
          %v2265 = vsub.s32 1, %v2264
          %v2266 = vrot.slane %v2257, %v2265
          %v2267 = vlaneseq
          %v2268 = vshrl.u32 %v2267, 7
          %v2269 = vsub.s32 2, %v2268
          %v2270 = vrot.slane %v2257, %v2269
          %v2271 = vlaneseq
          %v2272 = vshrl.u32 %v2271, 7
          %v2273 = vsub.s32 3, %v2272
          %v2274 = vrot.slane %v2257, %v2273
          %v2275 = vlaneseq
          %v2276 = vshrl.u32 %v2275, 7
          %v2277 = vsub.s32 4, %v2276
          %v2278 = vrot.slane %v2257, %v2277
          %v2279 = vlaneseq
          %v2280 = vshrl.u32 %v2279, 7
          %v2281 = vsub.s32 5, %v2280
          %v2282 = vrot.slane %v2257, %v2281
          %v2283 = vcombine.low %v2262, %v2266
          %v2284 = vcombine.low %v2270, %v2274
          %v2286 = vunpack.c.l.s4 1983009808
          %v2287 = vunpack.c.0.s8 %v2286
          %v2288 = vlaneseq
          %v2289 = vshrl.u32 %v2288, 7
          %v2290 = vsub.s32 %v2287, %v2289
          %v2291 = vrot.slane %v2283, %v2290
          %v2293 = vunpack.c.l.s4 1983009808
          %v2294 = vunpack.c.0.s8 %v2293
          %v2295 = vlaneseq
          %v2296 = vshrl.u32 %v2295, 7
          %v2297 = vsub.s32 %v2294, %v2296
          %v2298 = vrot.slane %v2284, %v2297
          %v2299 = vcombine.low %v2291, %v2298
          %v2300 = vcombine.low %v2278, %v2282
          %v2302 = vunpack.c.l.s4 1983009808
          %v2303 = vunpack.c.0.s8 %v2302
          %v2304 = vlaneseq
          %v2305 = vshrl.u32 %v2304, 7
          %v2306 = vsub.s32 %v2303, %v2305
          %v2307 = vrot.slane %v2300, %v2306
          %v2310 = vadd.f32 %v2255, %v2299
          %v2311 = vadd.f32 %v2256, %v2307
          %2312 = vst [vmem:[%s265] sm:$0xff] %v2310
          %2313 = vst [vmem:[%s265 + $0x8] sm:$0xf] %v2311
        $region44: #{tpu_custom_call.1} parent=35 // pred_fallthru
          _
        %s2314 = sand.u32 %s148, 1
        %s2315 = scalar_lea.sflag [#allocation4], %s2314
        %s2316 = sand.u32 %s148, 1
        %s2317 = smul.addr %s2316, 12
        %s2318 = scalar_lea.vmem [#allocation3], %s2317
        // Predicated region
        $region45: #{tpu_custom_call.1} parent=35 // pred_check
          %p2319 = pneg %p158
        $region46: #{tpu_custom_call.1} parent=35 // pred_check_branch
          %2321 = sbr.rel (%p2319) target = $region48
        $region47: #{tpu_custom_call.1} parent=35 // pred_region
          %s2322 = smul.u32 6, %s23
          %s2324 = ssub.s32 192, 192
          %2325 = vsyncadd %s2315, %s2324
          %s2326 = smul.addr %s2322, 32
          %s2327 = scalar_lea.hbm %s4, %s2326
          %s2329 = sshll.u32 %s2318, 4
          %s2330 = int_to_ptr.vmem [resolvable:$true] %s2329
          %2332 = dma.vmem_to_hbm [thread:$0]  %s2330, 192, %s2327, %s2315
        $region48: #{tpu_custom_call.1} parent=35 // pred_fallthru
          _
      $region36: #{tpu_custom_call.1} parent=5 // pred_fallthru
        _
      %p2333 = scmp.le.s32.totalorder 2, %s13
      // Predicated region
      $region49: #{tpu_custom_call.1} parent=5 // pred_check
        %p2334 = pneg %p2333
      $region50: #{tpu_custom_call.1} parent=5 // pred_check_branch
        %2336 = sbr.rel (%p2334) target = $region52
      $region51: #{tpu_custom_call.1} parent=5 // pred_region
        %s2337 = ssub.s32 %s13, 2
        // Predicated region
        $region53: #{tpu_custom_call.1} parent=51 // pred_check
          %p2338 = pneg %p164
        $region54: #{tpu_custom_call.1} parent=51 // pred_check_branch
          %2340 = sbr.rel (%p2338) target = $region56
        $region55: #{tpu_custom_call.1} parent=51 // pred_region
          %s2341 = sand.u32 %s149, 1
          %s2342 = scalar_lea.sflag [#allocation4], %s2341
          %s2343 = sand.u32 %s149, 1
          %s2344 = smul.addr %s2343, 12
          %s2345 = scalar_lea.vmem [#allocation3], %s2344
          %2346 = dma.done %s2342, 192
        $region56: #{tpu_custom_call.1} parent=51 // pred_fallthru
          _
      $region52: #{tpu_custom_call.1} parent=5 // pred_fallthru
        _
    $region6: #{tpu_custom_call.1} parent=1 // loop_footer
      %s17 = sadd.s32 1, %s13
    $region7: #{tpu_custom_call.1} parent=1 // loop_footer_branch
      %12 = sbr.rel target = $region3
    $region8: #{tpu_custom_call.1} parent=1 // loop_exit
      _
    %2347 = vsyncpa [#allocation4], 1
    %s2348 = scalar_lea.sflag [#allocation4], 1
    %2349 = vsyncpa %s2348, 1

</llo_original>
